<compile_context>
chip_gen: v7x
topology: tpu7x:2x2x1
jax: 0.10.0
libtpu: 0.0.40
codegen_flags: <defaults>
</compile_context>

<pallas_src>
import jax
import jax.numpy as jnp
from jax.experimental import pallas as pl
from jax.experimental.pallas import tpu as pltpu

CONTEXT_SIZE = 2
EMBEDDING_DIM = 10
HIDDEN = 128

test_sentence = "\n                When forty winters shall besiege thy brow, \n                And dig deep trenches in thy beauty's field, \n                Thy youth's proud livery, so gazed on now, \n                Will be a tatter'd weed, of small worth held: \n                Then being ask'd where all thy beauty lies, \n                Where all the treasure of thy lusty days, \n                To say, within thine own deep-sunken eyes, \n                Were an all-eating shame and thriftless praise. \n                How much more praise deserved thy beauty's use, \n                If thou couldst answer 'This fair child of mine \n                Shall sum my count and make my old excuse,' \n                Proving his beauty by succession thine! \n                This were to be new made when thou art old, \n                And see thy blood warm when thou feel'st it cold.\n                ".split()


def ngram_kernel(idx_ref, t_ref, b1_ref, w2_ref, b2_ref, out_ref):
    # idx_ref : (TB, C)        int32  per-tile context indices
    # t_ref   : (C*Vp, H)      f32    fused gather table  T[k*Vp + v] = emb[v] @ w1[k]
    # b1_ref  : (1, H)         f32
    # w2_ref  : (H, Vp)        f32    (padded cols are 0)
    # b2_ref  : (1, Vp)        f32    (padded entries are -1e30)
    # out_ref : (TB, Vp)       f32    log-probs (padded lanes junk, sliced off outside)
    TB, C = idx_ref.shape
    CVp = t_ref.shape[0]
    seg = CVp // C                                         # = Vp (padded vocab segment)

    ids = idx_ref[...]                                     # (TB, C) int32

    # Single one-hot over the fused (context, vocab) axis -> one clean MXU pass.
    col = jax.lax.broadcasted_iota(jnp.int32, (TB, CVp), 1)
    hit = col == ids[:, 0:1]
    for k in range(1, C):                                  # static unroll (C == 2)
        hit = hit | (col == (ids[:, k:k + 1] + k * seg))
    onehot = hit.astype(jnp.float32)                       # (TB, CVp)

    # Fused gather+Linear1, then ReLU.
    h = jnp.dot(onehot, t_ref[...], preferred_element_type=jnp.float32) + b1_ref[...]
    h = jnp.maximum(h, 0.0)                                # (TB, H)

    # Linear2; padded lanes get -1e30 straight from the bias (no runtime mask).
    logits = jnp.dot(h, w2_ref[...], preferred_element_type=jnp.float32) + b2_ref[...]

    # log_softmax over the vocab axis (PyTorch dim=1).
    m = jnp.max(logits, axis=-1, keepdims=True)
    shifted = logits - m
    lse = jnp.log(jnp.sum(jnp.exp(shifted), axis=-1, keepdims=True))
    out_ref[...] = shifted - lse


def _pick_block_b(B):
    """Whole batch per step on single-TC chips; split across the 2 TCs on v7x."""
    try:
        kind = jax.devices()[0].device_kind.lower()
    except Exception:  # pragma: no cover - e.g. interpret mode
        kind = ""
    n_tiles = 2 if "v7" in kind else 1
    return max(8, pl.cdiv(pl.cdiv(B, n_tiles), 8) * 8)


def ngram_forward(idx, emb, w1, b1, w2, b2, *, block_b=None):
    """idx: (B, CONTEXT_SIZE) int32. Returns (B, V) log-probabilities."""
    B, C = idx.shape
    V, D = emb.shape
    H = w1.shape[-1]
    assert w1.shape[0] == C * D

    Vp = pl.cdiv(V, 128) * 128
    CVp = C * Vp

    if block_b is None:
        block_b = _pick_block_b(B)
    Bp = pl.cdiv(B, block_b) * block_b

    idx_p = jnp.pad(idx, ((0, Bp - B), (0, 0)))

    # Fused gather table: T[k] = emb @ w1[k*D:(k+1)*D]  -> (C, V, H); pad V -> Vp, flatten.
    # Tiny one-time cost done by XLA outside the kernel.
    w1_r = w1.reshape(C, D, H)
    T = jnp.einsum('vd,cdh->cvh', emb, w1_r)
    T = jnp.pad(T, ((0, 0), (0, Vp - V), (0, 0))).reshape(CVp, H)

    w2_p = jnp.pad(w2, ((0, 0), (0, Vp - V)))
    b2_p = jnp.pad(b2, ((0, 0), (0, Vp - V)), constant_values=-1e30)

    grid = (Bp // block_b,)

    flops = 2 * Bp * (CVp * H + H * Vp)
    bytes_accessed = 4 * (idx_p.size + T.size + b1.size + w2_p.size
                          + b2_p.size + Bp * Vp)
    cost = pl.CostEstimate(flops=flops, transcendentals=Bp * Vp,
                           bytes_accessed=bytes_accessed)

    out = pl.pallas_call(
        ngram_kernel,
        out_shape=jax.ShapeDtypeStruct((Bp, Vp), jnp.float32),
        grid=grid,
        in_specs=[
            pl.BlockSpec((block_b, C), lambda i: (i, 0)),   # per-tile indices
            pl.BlockSpec((CVp, H), lambda i: (0, 0)),       # resident fused table
            pl.BlockSpec((1, H), lambda i: (0, 0)),
            pl.BlockSpec((H, Vp), lambda i: (0, 0)),        # resident w2 (lane-padded)
            pl.BlockSpec((1, Vp), lambda i: (0, 0)),        # b2 with -1e30 padded lanes
        ],
        out_specs=pl.BlockSpec((block_b, Vp), lambda i: (i, 0)),  # lane-dense stores
        compiler_params=pltpu.CompilerParams(
            dimension_semantics=("parallel",)),
        cost_estimate=cost,
    )(idx_p, T, b1, w2_p, b2_p)

    return out[:B, :V]


def reference_forward(idx, emb, w1, b1, w2, b2):
    x = emb[idx].reshape(idx.shape[0], -1)         # (B, CONTEXT*D)
    h = jnp.maximum(x @ w1 + b1, 0.0)
    logits = h @ w2 + b2
    return jax.nn.log_softmax(logits, axis=-1)


if __name__ == "__main__":
    # Build vocab exactly like the PyTorch script (sorted for determinism).
    vocb = sorted(set(test_sentence))
    word_to_idx = {w: i for i, w in enumerate(vocb)}
    V = len(word_to_idx)

    # All trigram contexts of the sonnet, cycled up to a batch of B rows.
    contexts = [[word_to_idx[test_sentence[i + j]] for j in range(CONTEXT_SIZE)]
                for i in range(len(test_sentence) - CONTEXT_SIZE)]
    B = 256
    idx = jnp.array([contexts[i % len(contexts)] for i in range(B)],
                    dtype=jnp.int32)                                   # (B, 2)

    # Deterministic synthetic parameters (nn.Embedding / nn.Linear shapes).
    key = jax.random.PRNGKey(0)
    k_emb, k_w1, k_b1, k_w2, k_b2 = jax.random.split(key, 5)
    emb = jax.random.normal(k_emb, (V, EMBEDDING_DIM), dtype=jnp.float32)
    w1 = jax.random.normal(k_w1, (CONTEXT_SIZE * EMBEDDING_DIM, HIDDEN),
                           dtype=jnp.float32) * 0.1
    b1 = jax.random.normal(k_b1, (1, HIDDEN), dtype=jnp.float32) * 0.1
    w2 = jax.random.normal(k_w2, (HIDDEN, V), dtype=jnp.float32) * 0.1
    b2 = jax.random.normal(k_b2, (1, V), dtype=jnp.float32) * 0.1

    log_prob = ngram_forward(idx, emb, w1, b1, w2, b2)
    jax.block_until_ready(log_prob)

    ref = reference_forward(idx, emb, w1, b1, w2, b2)
    assert log_prob.shape == (B, V)
    assert jnp.allclose(log_prob, ref, atol=1e-4, rtol=1e-4), "mismatch vs JAX reference"

    print("KERNEL_OK")
</pallas_src>

<mosaic_0001>
module attributes {stable_mosaic.version = 11 : i64} {
  func.func @ngram_kernel(%arg0: i32, %arg1: memref<256x2xi32, #tpu.memory_space<vmem>>, %arg2: memref<256x128xf32, #tpu.memory_space<vmem>>, %arg3: memref<1x128xf32, #tpu.memory_space<vmem>>, %arg4: memref<128x128xf32, #tpu.memory_space<vmem>>, %arg5: memref<1x128xf32, #tpu.memory_space<vmem>>, %arg6: memref<256x128xf32, #tpu.memory_space<vmem>>) attributes {dimension_semantics = [#tpu.dimension_semantics<parallel>], iteration_bounds = array<i64: 1>, scalar_prefetch = 0 : i64, scratch_operands = 0 : i64, tpu.core_type = #tpu.core_type<tc>, window_params = [{transform_indices = @transform_0, window_bounds = array<i64: 256, 2>}, {pipeline_mode = #tpu.pipeline_mode<synchronous>, transform_indices = @transform_1, window_bounds = array<i64: 256, 128>}, {pipeline_mode = #tpu.pipeline_mode<synchronous>, transform_indices = @transform_2, window_bounds = array<i64: 1, 128>}, {pipeline_mode = #tpu.pipeline_mode<synchronous>, transform_indices = @transform_3, window_bounds = array<i64: 128, 128>}, {pipeline_mode = #tpu.pipeline_mode<synchronous>, transform_indices = @transform_4, window_bounds = array<i64: 1, 128>}, {transform_indices = @transform_5, window_bounds = array<i64: 256, 128>}]} {
    %c0 = arith.constant 0 : index
    %c0_0 = arith.constant 0 : index
    %0 = vector.load %arg1[%c0, %c0_0] : memref<256x2xi32, #tpu.memory_space<vmem>>, vector<256x2xi32>
    %1 = tpu.iota {dimensions = array<i32: 1>} : vector<256x256xi32>
    %2 = vector.extract_strided_slice %0 {offsets = [0, 0], sizes = [256, 1], strides = [1, 1]} : vector<256x2xi32> to vector<256x1xi32>
    %3 = vector.broadcast %2 : vector<256x1xi32> to vector<256x256xi32>
    %4 = arith.cmpi eq, %1, %3 : vector<256x256xi32>
    %5 = vector.extract_strided_slice %0 {offsets = [0, 1], sizes = [256, 1], strides = [1, 1]} : vector<256x2xi32> to vector<256x1xi32>
    %c128_i32 = arith.constant 128 : i32
    %6 = vector.broadcast %c128_i32 : i32 to vector<256x1xi32>
    %7 = arith.addi %5, %6 : vector<256x1xi32>
    %8 = vector.broadcast %7 : vector<256x1xi32> to vector<256x256xi32>
    %9 = arith.cmpi eq, %1, %8 : vector<256x256xi32>
    %10 = arith.ori %4, %9 : vector<256x256xi1>
    %11 = arith.extui %10 : vector<256x256xi1> to vector<256x256xi32>
    %12 = arith.sitofp %11 : vector<256x256xi32> to vector<256x256xf32>
    %c0_1 = arith.constant 0 : index
    %c0_2 = arith.constant 0 : index
    %13 = vector.load %arg2[%c0_1, %c0_2] : memref<256x128xf32, #tpu.memory_space<vmem>>, vector<256x128xf32>
    %cst = arith.constant dense<0.000000e+00> : vector<256x128xf32>
    %14 = tpu.matmul %12, %13, %cst {dimension_numbers = #tpu.dot_dimension_numbers<[1], [0], [0], [1], [0, 0, 1, 1], [], []>} : vector<256x256xf32>, vector<256x128xf32>, vector<256x128xf32> -> vector<256x128xf32>
    %c0_3 = arith.constant 0 : index
    %c0_4 = arith.constant 0 : index
    %15 = vector.load %arg3[%c0_3, %c0_4] : memref<1x128xf32, #tpu.memory_space<vmem>>, vector<1x128xf32>
    %16 = vector.broadcast %15 : vector<1x128xf32> to vector<256x128xf32>
    %17 = arith.addf %14, %16 : vector<256x128xf32>
    %cst_5 = arith.constant 0.000000e+00 : f32
    %18 = vector.broadcast %cst_5 : f32 to vector<256x128xf32>
    %19 = arith.maximumf %17, %18 : vector<256x128xf32>
    %c0_6 = arith.constant 0 : index
    %c0_7 = arith.constant 0 : index
    %20 = vector.load %arg4[%c0_6, %c0_7] : memref<128x128xf32, #tpu.memory_space<vmem>>, vector<128x128xf32>
    %cst_8 = arith.constant dense<0.000000e+00> : vector<256x128xf32>
    %21 = tpu.matmul %19, %20, %cst_8 {dimension_numbers = #tpu.dot_dimension_numbers<[1], [0], [0], [1], [0, 0, 1, 1], [], []>} : vector<256x128xf32>, vector<128x128xf32>, vector<256x128xf32> -> vector<256x128xf32>
    %c0_9 = arith.constant 0 : index
    %c0_10 = arith.constant 0 : index
    %22 = vector.load %arg5[%c0_9, %c0_10] : memref<1x128xf32, #tpu.memory_space<vmem>>, vector<1x128xf32>
    %23 = vector.broadcast %22 : vector<1x128xf32> to vector<256x128xf32>
    %24 = arith.addf %21, %23 : vector<256x128xf32>
    %cst_11 = arith.constant dense<0xFF800000> : vector<256xf32>
    %25 = vector.multi_reduction <maximumf>, %24, %cst_11 [1] : vector<256x128xf32> to vector<256xf32>
    %26 = vector.shape_cast %25 : vector<256xf32> to vector<256x1xf32>
    %27 = vector.broadcast %26 : vector<256x1xf32> to vector<256x128xf32>
    %28 = arith.subf %24, %27 : vector<256x128xf32>
    %29 = math.exp %28 : vector<256x128xf32>
    %cst_12 = arith.constant dense<0.000000e+00> : vector<256xf32>
    %30 = vector.multi_reduction <add>, %29, %cst_12 [1] : vector<256x128xf32> to vector<256xf32>
    %31 = vector.shape_cast %30 : vector<256xf32> to vector<256x1xf32>
    %32 = math.log %31 : vector<256x1xf32>
    %33 = vector.broadcast %32 : vector<256x1xf32> to vector<256x128xf32>
    %34 = arith.subf %28, %33 : vector<256x128xf32>
    %c0_13 = arith.constant 0 : index
    %c0_14 = arith.constant 0 : index
    %35 = vector.load %arg6[%c0_13, %c0_14] : memref<256x128xf32, #tpu.memory_space<vmem>>, vector<256x128xf32>
    tpu.vector_store %arg6[%c0_13, %c0_14], %34 {strides = array<i32>} : memref<256x128xf32, #tpu.memory_space<vmem>>, vector<256x128xf32>,
    return
  }
  func.func @transform_0(%arg0: i32) -> (i32, i32) {
    %c0_i32 = arith.constant 0 : i32
    %c0_i32_0 = arith.constant 0 : i32
    return %arg0, %c0_i32 : i32, i32
  }
  func.func @transform_1(%arg0: i32) -> (i32, i32) {
    %c0_i32 = arith.constant 0 : i32
    %c0_i32_0 = arith.constant 0 : i32
    %c0_i32_1 = arith.constant 0 : i32
    return %c0_i32, %c0_i32_0 : i32, i32
  }
  func.func @transform_2(%arg0: i32) -> (i32, i32) {
    %c0_i32 = arith.constant 0 : i32
    %c0_i32_0 = arith.constant 0 : i32
    %c0_i32_1 = arith.constant 0 : i32
    return %c0_i32, %c0_i32_0 : i32, i32
  }
  func.func @transform_3(%arg0: i32) -> (i32, i32) {
    %c0_i32 = arith.constant 0 : i32
    %c0_i32_0 = arith.constant 0 : i32
    %c0_i32_1 = arith.constant 0 : i32
    return %c0_i32, %c0_i32_0 : i32, i32
  }
  func.func @transform_4(%arg0: i32) -> (i32, i32) {
    %c0_i32 = arith.constant 0 : i32
    %c0_i32_0 = arith.constant 0 : i32
    %c0_i32_1 = arith.constant 0 : i32
    return %c0_i32, %c0_i32_0 : i32, i32
  }
  func.func @transform_5(%arg0: i32) -> (i32, i32) {
    %c0_i32 = arith.constant 0 : i32
    %c0_i32_0 = arith.constant 0 : i32
    return %arg0, %c0_i32 : i32, i32
  }
}

</mosaic_0001>

<llo_original>
// kernel: tpu_custom_call.1
$region0: #{tpu_custom_call.1}
  #allocation0 [shape = 'u32[]', space=smem, size = 0x4, offset = 0x4, fixed_abs, tag = 'smem constant byte address 0x4 - core index']
  #allocation1 [shape = 'u32[144,128]{1,0:T(1,128)}', space=vmem, size = 0x12000, scoped, tag = 'internal scratch']
  %s0 = inlined_call_operand.vmem [shape: s32[256,2], index: 0, kind: input, shape index: {}]
  %s1 = inlined_call_operand.vmem [shape: f32[256,128], index: 1, kind: input, shape index: {}]
  %s2 = inlined_call_operand.vmem [shape: f32[1,128], index: 2, kind: input, shape index: {}]
  %s3 = inlined_call_operand.hbm [shape: f32[128,128], index: 3, kind: input, shape index: {}]
  %s4 = inlined_call_operand.vmem [shape: f32[1,128], index: 4, kind: input, shape index: {}]
  %s5 = inlined_call_operand.hbm [shape: f32[256,128], index: 5, kind: output, shape index: {}]
  %s6 = sld [smem:[#allocation0]]
  $region34: #{tpu_custom_call.1} parent=0
    _
  %s8 = ssub.s32 1, %s6
  %s9 = scalar_select 0, %s8, %s6
  $region1: #{tpu_custom_call.1} parent=0
    #allocation2 [shape = 'u8[65536]{0}', space=vmem, size = 0x10000, scoped, tag = 'input window, operand 3, single buffered']
    #allocation3 [shape = 's32[1]{0}', space=sflag, size = 0x4, scoped, tag = 'scoped memory for tpu_custom_call.1']
    #allocation4 [shape = 's32[1]{0}', space=sflag, size = 0x4, scoped, tag = 'scoped memory for tpu_custom_call.1']
    #allocation5 [shape = 'u8[131072]{0}', space=vmem, size = 0x20000, scoped, tag = 'output window, operand 0, single buffered']
    %10 = vsyncpa [#allocation3], 0
    %11 = vsyncpa [#allocation4], 0
    // Predicated region
    $region2: #{tpu_custom_call.1} parent=1 // pred_check
      _
    $region3: #{tpu_custom_call.1} parent=1 // pred_check_branch
      %13 = sbr.rel (0) target = $region5
    $region4: #{tpu_custom_call.1} parent=1 // pred_region
      _
    $region5: #{tpu_custom_call.1} parent=1 // pred_fallthru
      _
    // Predicated region
    $region6: #{tpu_custom_call.1} parent=1 // pred_check
      _
    $region7: #{tpu_custom_call.1} parent=1 // pred_check_branch
      %15 = sbr.rel (0) target = $region9
    $region8: #{tpu_custom_call.1} parent=1 // pred_region
      _
    $region9: #{tpu_custom_call.1} parent=1 // pred_fallthru
      _
    // Predicated region
    $region10: #{tpu_custom_call.1} parent=1 // pred_check
      _
    $region11: #{tpu_custom_call.1} parent=1 // pred_check_branch
      %17 = sbr.rel (0) target = $region13
    $region12: #{tpu_custom_call.1} parent=1 // pred_region
      _
    $region13: #{tpu_custom_call.1} parent=1 // pred_fallthru
      _
    // Predicated region
    $region14: #{tpu_custom_call.1} parent=1 // pred_check
      _
    $region15: #{tpu_custom_call.1} parent=1 // pred_check_branch
      %19 = sbr.rel (0) target = $region17
    $region16: #{tpu_custom_call.1} parent=1 // pred_region
      %s21 = ssub.s32 2048, 2048
      %22 = vsyncadd [#allocation3], %s21
      %s23 = sshll.u32 [#allocation2], 4
      %s24 = int_to_ptr.vmem [resolvable:$true] %s23
      %29 = dma.hbm_to_vmem [thread:$0]  %s3, 2048, %s24, [#allocation3], 128, 128, 8
    $region17: #{tpu_custom_call.1} parent=1 // pred_fallthru
      _
    // Predicated region
    $region18: #{tpu_custom_call.1} parent=1 // pred_check
      _
    $region19: #{tpu_custom_call.1} parent=1 // pred_check_branch
      %31 = sbr.rel (0) target = $region21
    $region20: #{tpu_custom_call.1} parent=1 // pred_region
      _
    $region21: #{tpu_custom_call.1} parent=1 // pred_fallthru
      _
    // Predicated region
    $region22: #{tpu_custom_call.1} parent=1 // pred_check
      _
    $region23: #{tpu_custom_call.1} parent=1 // pred_check_branch
      %33 = sbr.rel (0) target = $region25
    $region24: #{tpu_custom_call.1} parent=1 // pred_region
      %34 = dma.done [#allocation3], 2048
    $region25: #{tpu_custom_call.1} parent=1 // pred_fallthru
      _
    %v35 = vld [vmem:[%s0] sm:$0xff]
    %v36 = vld [vmem:[%s0 + $0x8] sm:$0xff]
    %v37 = vld [vmem:[%s0 + $0x10] sm:$0xff]
    %v38 = vld [vmem:[%s0 + $0x18] sm:$0xff]
    %v39 = vld [vmem:[%s0 + $0x20] sm:$0xff]
    %v40 = vld [vmem:[%s0 + $0x28] sm:$0xff]
    %v41 = vld [vmem:[%s0 + $0x30] sm:$0xff]
    %v42 = vld [vmem:[%s0 + $0x38] sm:$0xff]
    %v43 = vld [vmem:[%s0 + $0x40] sm:$0xff]
    %v44 = vld [vmem:[%s0 + $0x48] sm:$0xff]
    %v45 = vld [vmem:[%s0 + $0x50] sm:$0xff]
    %v46 = vld [vmem:[%s0 + $0x58] sm:$0xff]
    %v47 = vld [vmem:[%s0 + $0x60] sm:$0xff]
    %v48 = vld [vmem:[%s0 + $0x68] sm:$0xff]
    %v49 = vld [vmem:[%s0 + $0x70] sm:$0xff]
    %v50 = vld [vmem:[%s0 + $0x78] sm:$0xff]
    %v51 = vld [vmem:[%s0 + $0x80] sm:$0xff]
    %v52 = vld [vmem:[%s0 + $0x88] sm:$0xff]
    %v53 = vld [vmem:[%s0 + $0x90] sm:$0xff]
    %v54 = vld [vmem:[%s0 + $0x98] sm:$0xff]
    %v55 = vld [vmem:[%s0 + $0xa0] sm:$0xff]
    %v56 = vld [vmem:[%s0 + $0xa8] sm:$0xff]
    %v57 = vld [vmem:[%s0 + $0xb0] sm:$0xff]
    %v58 = vld [vmem:[%s0 + $0xb8] sm:$0xff]
    %v59 = vld [vmem:[%s0 + $0xc0] sm:$0xff]
    %v60 = vld [vmem:[%s0 + $0xc8] sm:$0xff]
    %v61 = vld [vmem:[%s0 + $0xd0] sm:$0xff]
    %v62 = vld [vmem:[%s0 + $0xd8] sm:$0xff]
    %v63 = vld [vmem:[%s0 + $0xe0] sm:$0xff]
    %v64 = vld [vmem:[%s0 + $0xe8] sm:$0xff]
    %v65 = vld [vmem:[%s0 + $0xf0] sm:$0xff]
    %v66 = vld [vmem:[%s0 + $0xf8] sm:$0xff]
    %v67 = vlaneseq
    %v68 = vand.u32 %v67, 127
    %v69 = vadd.s32 %v68, 128
    %70 = vset.pattern.permute.xlu0 0
    %71 = vperm.xlu0 %70, %v35
    %v72 = vpop.permute.xlu0 %71
    %73 = vset.pattern.permute.xlu0 0
    %74 = vperm.xlu0 %73, %v36
    %v75 = vpop.permute.xlu0 %74
    %76 = vset.pattern.permute.xlu0 0
    %77 = vperm.xlu0 %76, %v37
    %v78 = vpop.permute.xlu0 %77
    %79 = vset.pattern.permute.xlu0 0
    %80 = vperm.xlu0 %79, %v38
    %v81 = vpop.permute.xlu0 %80
    %82 = vset.pattern.permute.xlu0 0
    %83 = vperm.xlu0 %82, %v39
    %v84 = vpop.permute.xlu0 %83
    %85 = vset.pattern.permute.xlu0 0
    %86 = vperm.xlu0 %85, %v40
    %v87 = vpop.permute.xlu0 %86
    %88 = vset.pattern.permute.xlu0 0
    %89 = vperm.xlu0 %88, %v41
    %v90 = vpop.permute.xlu0 %89
    %91 = vset.pattern.permute.xlu0 0
    %92 = vperm.xlu0 %91, %v42
    %v93 = vpop.permute.xlu0 %92
    %94 = vset.pattern.permute.xlu0 0
    %95 = vperm.xlu0 %94, %v43
    %v96 = vpop.permute.xlu0 %95
    %97 = vset.pattern.permute.xlu0 0
    %98 = vperm.xlu0 %97, %v44
    %v99 = vpop.permute.xlu0 %98
    %100 = vset.pattern.permute.xlu0 0
    %101 = vperm.xlu0 %100, %v45
    %v102 = vpop.permute.xlu0 %101
    %103 = vset.pattern.permute.xlu0 0
    %104 = vperm.xlu0 %103, %v46
    %v105 = vpop.permute.xlu0 %104
    %106 = vset.pattern.permute.xlu0 0
    %107 = vperm.xlu0 %106, %v47
    %v108 = vpop.permute.xlu0 %107
    %109 = vset.pattern.permute.xlu0 0
    %110 = vperm.xlu0 %109, %v48
    %v111 = vpop.permute.xlu0 %110
    %112 = vset.pattern.permute.xlu0 0
    %113 = vperm.xlu0 %112, %v49
    %v114 = vpop.permute.xlu0 %113
    %115 = vset.pattern.permute.xlu0 0
    %116 = vperm.xlu0 %115, %v50
    %v117 = vpop.permute.xlu0 %116
    %118 = vset.pattern.permute.xlu0 0
    %119 = vperm.xlu0 %118, %v51
    %v120 = vpop.permute.xlu0 %119
    %121 = vset.pattern.permute.xlu0 0
    %122 = vperm.xlu0 %121, %v52
    %v123 = vpop.permute.xlu0 %122
    %124 = vset.pattern.permute.xlu0 0
    %125 = vperm.xlu0 %124, %v53
    %v126 = vpop.permute.xlu0 %125
    %127 = vset.pattern.permute.xlu0 0
    %128 = vperm.xlu0 %127, %v54
    %v129 = vpop.permute.xlu0 %128
    %130 = vset.pattern.permute.xlu0 0
    %131 = vperm.xlu0 %130, %v55
    %v132 = vpop.permute.xlu0 %131
    %133 = vset.pattern.permute.xlu0 0
    %134 = vperm.xlu0 %133, %v56
    %v135 = vpop.permute.xlu0 %134
    %136 = vset.pattern.permute.xlu0 0
    %137 = vperm.xlu0 %136, %v57
    %v138 = vpop.permute.xlu0 %137
    %139 = vset.pattern.permute.xlu0 0
    %140 = vperm.xlu0 %139, %v58
    %v141 = vpop.permute.xlu0 %140
    %142 = vset.pattern.permute.xlu0 0
    %143 = vperm.xlu0 %142, %v59
    %v144 = vpop.permute.xlu0 %143
    %145 = vset.pattern.permute.xlu0 0
    %146 = vperm.xlu0 %145, %v60
    %v147 = vpop.permute.xlu0 %146
    %148 = vset.pattern.permute.xlu0 0
    %149 = vperm.xlu0 %148, %v61
    %v150 = vpop.permute.xlu0 %149
    %151 = vset.pattern.permute.xlu0 0
    %152 = vperm.xlu0 %151, %v62
    %v153 = vpop.permute.xlu0 %152
    %154 = vset.pattern.permute.xlu0 0
    %155 = vperm.xlu0 %154, %v63
    %v156 = vpop.permute.xlu0 %155
    %157 = vset.pattern.permute.xlu0 0
    %158 = vperm.xlu0 %157, %v64
    %v159 = vpop.permute.xlu0 %158
    %160 = vset.pattern.permute.xlu0 0
    %161 = vperm.xlu0 %160, %v65
    %v162 = vpop.permute.xlu0 %161
    %163 = vset.pattern.permute.xlu0 0
    %164 = vperm.xlu0 %163, %v66
    %v165 = vpop.permute.xlu0 %164
    %vm166 = vcmp.eq.s32.totalorder %v68, %v72
    %vm167 = vcmp.eq.s32.totalorder %v69, %v72
    %vm168 = vcmp.eq.s32.totalorder %v68, %v75
    %vm169 = vcmp.eq.s32.totalorder %v69, %v75
    %vm170 = vcmp.eq.s32.totalorder %v68, %v78
    %vm171 = vcmp.eq.s32.totalorder %v69, %v78
    %vm172 = vcmp.eq.s32.totalorder %v68, %v81
    %vm173 = vcmp.eq.s32.totalorder %v69, %v81
    %vm174 = vcmp.eq.s32.totalorder %v68, %v84
    %vm175 = vcmp.eq.s32.totalorder %v69, %v84
    %vm176 = vcmp.eq.s32.totalorder %v68, %v87
    %vm177 = vcmp.eq.s32.totalorder %v69, %v87
    %vm178 = vcmp.eq.s32.totalorder %v68, %v90
    %vm179 = vcmp.eq.s32.totalorder %v69, %v90
    %vm180 = vcmp.eq.s32.totalorder %v68, %v93
    %vm181 = vcmp.eq.s32.totalorder %v69, %v93
    %vm182 = vcmp.eq.s32.totalorder %v68, %v96
    %vm183 = vcmp.eq.s32.totalorder %v69, %v96
    %vm184 = vcmp.eq.s32.totalorder %v68, %v99
    %vm185 = vcmp.eq.s32.totalorder %v69, %v99
    %vm186 = vcmp.eq.s32.totalorder %v68, %v102
    %vm187 = vcmp.eq.s32.totalorder %v69, %v102
    %vm188 = vcmp.eq.s32.totalorder %v68, %v105
    %vm189 = vcmp.eq.s32.totalorder %v69, %v105
    %vm190 = vcmp.eq.s32.totalorder %v68, %v108
    %vm191 = vcmp.eq.s32.totalorder %v69, %v108
    %vm192 = vcmp.eq.s32.totalorder %v68, %v111
    %vm193 = vcmp.eq.s32.totalorder %v69, %v111
    %vm194 = vcmp.eq.s32.totalorder %v68, %v114
    %vm195 = vcmp.eq.s32.totalorder %v69, %v114
    %vm196 = vcmp.eq.s32.totalorder %v68, %v117
    %vm197 = vcmp.eq.s32.totalorder %v69, %v117
    %vm198 = vcmp.eq.s32.totalorder %v68, %v120
    %vm199 = vcmp.eq.s32.totalorder %v69, %v120
    %vm200 = vcmp.eq.s32.totalorder %v68, %v123
    %vm201 = vcmp.eq.s32.totalorder %v69, %v123
    %vm202 = vcmp.eq.s32.totalorder %v68, %v126
    %vm203 = vcmp.eq.s32.totalorder %v69, %v126
    %vm204 = vcmp.eq.s32.totalorder %v68, %v129
    %vm205 = vcmp.eq.s32.totalorder %v69, %v129
    %vm206 = vcmp.eq.s32.totalorder %v68, %v132
    %vm207 = vcmp.eq.s32.totalorder %v69, %v132
    %vm208 = vcmp.eq.s32.totalorder %v68, %v135
    %vm209 = vcmp.eq.s32.totalorder %v69, %v135
    %vm210 = vcmp.eq.s32.totalorder %v68, %v138
    %vm211 = vcmp.eq.s32.totalorder %v69, %v138
    %vm212 = vcmp.eq.s32.totalorder %v68, %v141
    %vm213 = vcmp.eq.s32.totalorder %v69, %v141
    %vm214 = vcmp.eq.s32.totalorder %v68, %v144
    %vm215 = vcmp.eq.s32.totalorder %v69, %v144
    %vm216 = vcmp.eq.s32.totalorder %v68, %v147
    %vm217 = vcmp.eq.s32.totalorder %v69, %v147
    %vm218 = vcmp.eq.s32.totalorder %v68, %v150
    %vm219 = vcmp.eq.s32.totalorder %v69, %v150
    %vm220 = vcmp.eq.s32.totalorder %v68, %v153
    %vm221 = vcmp.eq.s32.totalorder %v69, %v153
    %vm222 = vcmp.eq.s32.totalorder %v68, %v156
    %vm223 = vcmp.eq.s32.totalorder %v69, %v156
    %vm224 = vcmp.eq.s32.totalorder %v68, %v159
    %vm225 = vcmp.eq.s32.totalorder %v69, %v159
    %vm226 = vcmp.eq.s32.totalorder %v68, %v162
    %vm227 = vcmp.eq.s32.totalorder %v69, %v162
    %vm228 = vcmp.eq.s32.totalorder %v68, %v165
    %vm229 = vcmp.eq.s32.totalorder %v69, %v165
    %v230 = vadd.s32 %v35, 128
    %v231 = vadd.s32 %v36, 128
    %v232 = vadd.s32 %v37, 128
    %v233 = vadd.s32 %v38, 128
    %v234 = vadd.s32 %v39, 128
    %v235 = vadd.s32 %v40, 128
    %v236 = vadd.s32 %v41, 128
    %v237 = vadd.s32 %v42, 128
    %v238 = vadd.s32 %v43, 128
    %v239 = vadd.s32 %v44, 128
    %v240 = vadd.s32 %v45, 128
    %v241 = vadd.s32 %v46, 128
    %v242 = vadd.s32 %v47, 128
    %v243 = vadd.s32 %v48, 128
    %v244 = vadd.s32 %v49, 128
    %v245 = vadd.s32 %v50, 128
    %v246 = vadd.s32 %v51, 128
    %v247 = vadd.s32 %v52, 128
    %v248 = vadd.s32 %v53, 128
    %v249 = vadd.s32 %v54, 128
    %v250 = vadd.s32 %v55, 128
    %v251 = vadd.s32 %v56, 128
    %v252 = vadd.s32 %v57, 128
    %v253 = vadd.s32 %v58, 128
    %v254 = vadd.s32 %v59, 128
    %v255 = vadd.s32 %v60, 128
    %v256 = vadd.s32 %v61, 128
    %v257 = vadd.s32 %v62, 128
    %v258 = vadd.s32 %v63, 128
    %v259 = vadd.s32 %v64, 128
    %v260 = vadd.s32 %v65, 128
    %v261 = vadd.s32 %v66, 128
    %262 = vset.pattern.permute.xlu0 1
    %263 = vperm.xlu0 %262, %v230
    %v264 = vpop.permute.xlu0 %263
    %265 = vset.pattern.permute.xlu0 1
    %266 = vperm.xlu0 %265, %v231
    %v267 = vpop.permute.xlu0 %266
    %268 = vset.pattern.permute.xlu0 1
    %269 = vperm.xlu0 %268, %v232
    %v270 = vpop.permute.xlu0 %269
    %271 = vset.pattern.permute.xlu0 1
    %272 = vperm.xlu0 %271, %v233
    %v273 = vpop.permute.xlu0 %272
    %274 = vset.pattern.permute.xlu0 1
    %275 = vperm.xlu0 %274, %v234
    %v276 = vpop.permute.xlu0 %275
    %277 = vset.pattern.permute.xlu0 1
    %278 = vperm.xlu0 %277, %v235
    %v279 = vpop.permute.xlu0 %278
    %280 = vset.pattern.permute.xlu0 1
    %281 = vperm.xlu0 %280, %v236
    %v282 = vpop.permute.xlu0 %281
    %283 = vset.pattern.permute.xlu0 1
    %284 = vperm.xlu0 %283, %v237
    %v285 = vpop.permute.xlu0 %284
    %286 = vset.pattern.permute.xlu0 1
    %287 = vperm.xlu0 %286, %v238
    %v288 = vpop.permute.xlu0 %287
    %289 = vset.pattern.permute.xlu0 1
    %290 = vperm.xlu0 %289, %v239
    %v291 = vpop.permute.xlu0 %290
    %292 = vset.pattern.permute.xlu0 1
    %293 = vperm.xlu0 %292, %v240
    %v294 = vpop.permute.xlu0 %293
    %295 = vset.pattern.permute.xlu0 1
    %296 = vperm.xlu0 %295, %v241
    %v297 = vpop.permute.xlu0 %296
    %298 = vset.pattern.permute.xlu0 1
    %299 = vperm.xlu0 %298, %v242
    %v300 = vpop.permute.xlu0 %299
    %301 = vset.pattern.permute.xlu0 1
    %302 = vperm.xlu0 %301, %v243
    %v303 = vpop.permute.xlu0 %302
    %304 = vset.pattern.permute.xlu0 1
    %305 = vperm.xlu0 %304, %v244
    %v306 = vpop.permute.xlu0 %305
    %307 = vset.pattern.permute.xlu0 1
    %308 = vperm.xlu0 %307, %v245
    %v309 = vpop.permute.xlu0 %308
    %310 = vset.pattern.permute.xlu0 1
    %311 = vperm.xlu0 %310, %v246
    %v312 = vpop.permute.xlu0 %311
    %313 = vset.pattern.permute.xlu0 1
    %314 = vperm.xlu0 %313, %v247
    %v315 = vpop.permute.xlu0 %314
    %316 = vset.pattern.permute.xlu0 1
    %317 = vperm.xlu0 %316, %v248
    %v318 = vpop.permute.xlu0 %317
    %319 = vset.pattern.permute.xlu0 1
    %320 = vperm.xlu0 %319, %v249
    %v321 = vpop.permute.xlu0 %320
    %322 = vset.pattern.permute.xlu0 1
    %323 = vperm.xlu0 %322, %v250
    %v324 = vpop.permute.xlu0 %323
    %325 = vset.pattern.permute.xlu0 1
    %326 = vperm.xlu0 %325, %v251
    %v327 = vpop.permute.xlu0 %326
    %328 = vset.pattern.permute.xlu0 1
    %329 = vperm.xlu0 %328, %v252
    %v330 = vpop.permute.xlu0 %329
    %331 = vset.pattern.permute.xlu0 1
    %332 = vperm.xlu0 %331, %v253
    %v333 = vpop.permute.xlu0 %332
    %334 = vset.pattern.permute.xlu0 1
    %335 = vperm.xlu0 %334, %v254
    %v336 = vpop.permute.xlu0 %335
    %337 = vset.pattern.permute.xlu0 1
    %338 = vperm.xlu0 %337, %v255
    %v339 = vpop.permute.xlu0 %338
    %340 = vset.pattern.permute.xlu0 1
    %341 = vperm.xlu0 %340, %v256
    %v342 = vpop.permute.xlu0 %341
    %343 = vset.pattern.permute.xlu0 1
    %344 = vperm.xlu0 %343, %v257
    %v345 = vpop.permute.xlu0 %344
    %346 = vset.pattern.permute.xlu0 1
    %347 = vperm.xlu0 %346, %v258
    %v348 = vpop.permute.xlu0 %347
    %349 = vset.pattern.permute.xlu0 1
    %350 = vperm.xlu0 %349, %v259
    %v351 = vpop.permute.xlu0 %350
    %352 = vset.pattern.permute.xlu0 1
    %353 = vperm.xlu0 %352, %v260
    %v354 = vpop.permute.xlu0 %353
    %355 = vset.pattern.permute.xlu0 1
    %356 = vperm.xlu0 %355, %v261
    %v357 = vpop.permute.xlu0 %356
    %vm358 = vcmp.eq.s32.totalorder %v68, %v264
    %vm359 = vcmp.eq.s32.totalorder %v69, %v264
    %vm360 = vcmp.eq.s32.totalorder %v68, %v267
    %vm361 = vcmp.eq.s32.totalorder %v69, %v267
    %vm362 = vcmp.eq.s32.totalorder %v68, %v270
    %vm363 = vcmp.eq.s32.totalorder %v69, %v270
    %vm364 = vcmp.eq.s32.totalorder %v68, %v273
    %vm365 = vcmp.eq.s32.totalorder %v69, %v273
    %vm366 = vcmp.eq.s32.totalorder %v68, %v276
    %vm367 = vcmp.eq.s32.totalorder %v69, %v276
    %vm368 = vcmp.eq.s32.totalorder %v68, %v279
    %vm369 = vcmp.eq.s32.totalorder %v69, %v279
    %vm370 = vcmp.eq.s32.totalorder %v68, %v282
    %vm371 = vcmp.eq.s32.totalorder %v69, %v282
    %vm372 = vcmp.eq.s32.totalorder %v68, %v285
    %vm373 = vcmp.eq.s32.totalorder %v69, %v285
    %vm374 = vcmp.eq.s32.totalorder %v68, %v288
    %vm375 = vcmp.eq.s32.totalorder %v69, %v288
    %vm376 = vcmp.eq.s32.totalorder %v68, %v291
    %vm377 = vcmp.eq.s32.totalorder %v69, %v291
    %vm378 = vcmp.eq.s32.totalorder %v68, %v294
    %vm379 = vcmp.eq.s32.totalorder %v69, %v294
    %vm380 = vcmp.eq.s32.totalorder %v68, %v297
    %vm381 = vcmp.eq.s32.totalorder %v69, %v297
    %vm382 = vcmp.eq.s32.totalorder %v68, %v300
    %vm383 = vcmp.eq.s32.totalorder %v69, %v300
    %vm384 = vcmp.eq.s32.totalorder %v68, %v303
    %vm385 = vcmp.eq.s32.totalorder %v69, %v303
    %vm386 = vcmp.eq.s32.totalorder %v68, %v306
    %vm387 = vcmp.eq.s32.totalorder %v69, %v306
    %vm388 = vcmp.eq.s32.totalorder %v68, %v309
    %vm389 = vcmp.eq.s32.totalorder %v69, %v309
    %vm390 = vcmp.eq.s32.totalorder %v68, %v312
    %vm391 = vcmp.eq.s32.totalorder %v69, %v312
    %vm392 = vcmp.eq.s32.totalorder %v68, %v315
    %vm393 = vcmp.eq.s32.totalorder %v69, %v315
    %vm394 = vcmp.eq.s32.totalorder %v68, %v318
    %vm395 = vcmp.eq.s32.totalorder %v69, %v318
    %vm396 = vcmp.eq.s32.totalorder %v68, %v321
    %vm397 = vcmp.eq.s32.totalorder %v69, %v321
    %vm398 = vcmp.eq.s32.totalorder %v68, %v324
    %vm399 = vcmp.eq.s32.totalorder %v69, %v324
    %vm400 = vcmp.eq.s32.totalorder %v68, %v327
    %vm401 = vcmp.eq.s32.totalorder %v69, %v327
    %vm402 = vcmp.eq.s32.totalorder %v68, %v330
    %vm403 = vcmp.eq.s32.totalorder %v69, %v330
    %vm404 = vcmp.eq.s32.totalorder %v68, %v333
    %vm405 = vcmp.eq.s32.totalorder %v69, %v333
    %vm406 = vcmp.eq.s32.totalorder %v68, %v336
    %vm407 = vcmp.eq.s32.totalorder %v69, %v336
    %vm408 = vcmp.eq.s32.totalorder %v68, %v339
    %vm409 = vcmp.eq.s32.totalorder %v69, %v339
    %vm410 = vcmp.eq.s32.totalorder %v68, %v342
    %vm411 = vcmp.eq.s32.totalorder %v69, %v342
    %vm412 = vcmp.eq.s32.totalorder %v68, %v345
    %vm413 = vcmp.eq.s32.totalorder %v69, %v345
    %vm414 = vcmp.eq.s32.totalorder %v68, %v348
    %vm415 = vcmp.eq.s32.totalorder %v69, %v348
    %vm416 = vcmp.eq.s32.totalorder %v68, %v351
    %vm417 = vcmp.eq.s32.totalorder %v69, %v351
    %vm418 = vcmp.eq.s32.totalorder %v68, %v354
    %vm419 = vcmp.eq.s32.totalorder %v69, %v354
    %vm420 = vcmp.eq.s32.totalorder %v68, %v357
    %vm421 = vcmp.eq.s32.totalorder %v69, %v357
    %vm422 = vmor %vm166, %vm358
    %vm423 = vmor %vm167, %vm359
    %vm424 = vmor %vm168, %vm360
    %vm425 = vmor %vm169, %vm361
    %vm426 = vmor %vm170, %vm362
    %vm427 = vmor %vm171, %vm363
    %vm428 = vmor %vm172, %vm364
    %vm429 = vmor %vm173, %vm365
    %vm430 = vmor %vm174, %vm366
    %vm431 = vmor %vm175, %vm367
    %vm432 = vmor %vm176, %vm368
    %vm433 = vmor %vm177, %vm369
    %vm434 = vmor %vm178, %vm370
    %vm435 = vmor %vm179, %vm371
    %vm436 = vmor %vm180, %vm372
    %vm437 = vmor %vm181, %vm373
    %vm438 = vmor %vm182, %vm374
    %vm439 = vmor %vm183, %vm375
    %vm440 = vmor %vm184, %vm376
    %vm441 = vmor %vm185, %vm377
    %vm442 = vmor %vm186, %vm378
    %vm443 = vmor %vm187, %vm379
    %vm444 = vmor %vm188, %vm380
    %vm445 = vmor %vm189, %vm381
    %vm446 = vmor %vm190, %vm382
    %vm447 = vmor %vm191, %vm383
    %vm448 = vmor %vm192, %vm384
    %vm449 = vmor %vm193, %vm385
    %vm450 = vmor %vm194, %vm386
    %vm451 = vmor %vm195, %vm387
    %vm452 = vmor %vm196, %vm388
    %vm453 = vmor %vm197, %vm389
    %vm454 = vmor %vm198, %vm390
    %vm455 = vmor %vm199, %vm391
    %vm456 = vmor %vm200, %vm392
    %vm457 = vmor %vm201, %vm393
    %vm458 = vmor %vm202, %vm394
    %vm459 = vmor %vm203, %vm395
    %vm460 = vmor %vm204, %vm396
    %vm461 = vmor %vm205, %vm397
    %vm462 = vmor %vm206, %vm398
    %vm463 = vmor %vm207, %vm399
    %vm464 = vmor %vm208, %vm400
    %vm465 = vmor %vm209, %vm401
    %vm466 = vmor %vm210, %vm402
    %vm467 = vmor %vm211, %vm403
    %vm468 = vmor %vm212, %vm404
    %vm469 = vmor %vm213, %vm405
    %vm470 = vmor %vm214, %vm406
    %vm471 = vmor %vm215, %vm407
    %vm472 = vmor %vm216, %vm408
    %vm473 = vmor %vm217, %vm409
    %vm474 = vmor %vm218, %vm410
    %vm475 = vmor %vm219, %vm411
    %vm476 = vmor %vm220, %vm412
    %vm477 = vmor %vm221, %vm413
    %vm478 = vmor %vm222, %vm414
    %vm479 = vmor %vm223, %vm415
    %vm480 = vmor %vm224, %vm416
    %vm481 = vmor %vm225, %vm417
    %vm482 = vmor %vm226, %vm418
    %vm483 = vmor %vm227, %vm419
    %vm484 = vmor %vm228, %vm420
    %vm485 = vmor %vm229, %vm421
    %v486 = vsel %vm422, 1, 0
    %v487 = vsel %vm423, 1, 0
    %v488 = vsel %vm424, 1, 0
    %v489 = vsel %vm425, 1, 0
    %v490 = vsel %vm426, 1, 0
    %v491 = vsel %vm427, 1, 0
    %v492 = vsel %vm428, 1, 0
    %v493 = vsel %vm429, 1, 0
    %v494 = vsel %vm430, 1, 0
    %v495 = vsel %vm431, 1, 0
    %v496 = vsel %vm432, 1, 0
    %v497 = vsel %vm433, 1, 0
    %v498 = vsel %vm434, 1, 0
    %v499 = vsel %vm435, 1, 0
    %v500 = vsel %vm436, 1, 0
    %v501 = vsel %vm437, 1, 0
    %v502 = vsel %vm438, 1, 0
    %v503 = vsel %vm439, 1, 0
    %v504 = vsel %vm440, 1, 0
    %v505 = vsel %vm441, 1, 0
    %v506 = vsel %vm442, 1, 0
    %v507 = vsel %vm443, 1, 0
    %v508 = vsel %vm444, 1, 0
    %v509 = vsel %vm445, 1, 0
    %v510 = vsel %vm446, 1, 0
    %v511 = vsel %vm447, 1, 0
    %v512 = vsel %vm448, 1, 0
    %v513 = vsel %vm449, 1, 0
    %v514 = vsel %vm450, 1, 0
    %v515 = vsel %vm451, 1, 0
    %v516 = vsel %vm452, 1, 0
    %v517 = vsel %vm453, 1, 0
    %v518 = vsel %vm454, 1, 0
    %v519 = vsel %vm455, 1, 0
    %v520 = vsel %vm456, 1, 0
    %v521 = vsel %vm457, 1, 0
    %v522 = vsel %vm458, 1, 0
    %v523 = vsel %vm459, 1, 0
    %v524 = vsel %vm460, 1, 0
    %v525 = vsel %vm461, 1, 0
    %v526 = vsel %vm462, 1, 0
    %v527 = vsel %vm463, 1, 0
    %v528 = vsel %vm464, 1, 0
    %v529 = vsel %vm465, 1, 0
    %v530 = vsel %vm466, 1, 0
    %v531 = vsel %vm467, 1, 0
    %v532 = vsel %vm468, 1, 0
    %v533 = vsel %vm469, 1, 0
    %v534 = vsel %vm470, 1, 0
    %v535 = vsel %vm471, 1, 0
    %v536 = vsel %vm472, 1, 0
    %v537 = vsel %vm473, 1, 0
    %v538 = vsel %vm474, 1, 0
    %v539 = vsel %vm475, 1, 0
    %v540 = vsel %vm476, 1, 0
    %v541 = vsel %vm477, 1, 0
    %v542 = vsel %vm478, 1, 0
    %v543 = vsel %vm479, 1, 0
    %v544 = vsel %vm480, 1, 0
    %v545 = vsel %vm481, 1, 0
    %v546 = vsel %vm482, 1, 0
    %v547 = vsel %vm483, 1, 0
    %v548 = vsel %vm484, 1, 0
    %v549 = vsel %vm485, 1, 0
    %v550 = vcvt.s32.f32 %v486
    %v551 = vcvt.s32.f32 %v487
    %v552 = vcvt.s32.f32 %v488
    %v553 = vcvt.s32.f32 %v489
    %v554 = vcvt.s32.f32 %v490
    %v555 = vcvt.s32.f32 %v491
    %v556 = vcvt.s32.f32 %v492
    %v557 = vcvt.s32.f32 %v493
    %v558 = vcvt.s32.f32 %v494
    %v559 = vcvt.s32.f32 %v495
    %v560 = vcvt.s32.f32 %v496
    %v561 = vcvt.s32.f32 %v497
    %v562 = vcvt.s32.f32 %v498
    %v563 = vcvt.s32.f32 %v499
    %v564 = vcvt.s32.f32 %v500
    %v565 = vcvt.s32.f32 %v501
    %v566 = vcvt.s32.f32 %v502
    %v567 = vcvt.s32.f32 %v503
    %v568 = vcvt.s32.f32 %v504
    %v569 = vcvt.s32.f32 %v505
    %v570 = vcvt.s32.f32 %v506
    %v571 = vcvt.s32.f32 %v507
    %v572 = vcvt.s32.f32 %v508
    %v573 = vcvt.s32.f32 %v509
    %v574 = vcvt.s32.f32 %v510
    %v575 = vcvt.s32.f32 %v511
    %v576 = vcvt.s32.f32 %v512
    %v577 = vcvt.s32.f32 %v513
    %v578 = vcvt.s32.f32 %v514
    %v579 = vcvt.s32.f32 %v515
    %v580 = vcvt.s32.f32 %v516
    %v581 = vcvt.s32.f32 %v517
    %v582 = vcvt.s32.f32 %v518
    %v583 = vcvt.s32.f32 %v519
    %v584 = vcvt.s32.f32 %v520
    %v585 = vcvt.s32.f32 %v521
    %v586 = vcvt.s32.f32 %v522
    %v587 = vcvt.s32.f32 %v523
    %v588 = vcvt.s32.f32 %v524
    %v589 = vcvt.s32.f32 %v525
    %v590 = vcvt.s32.f32 %v526
    %v591 = vcvt.s32.f32 %v527
    %v592 = vcvt.s32.f32 %v528
    %v593 = vcvt.s32.f32 %v529
    %v594 = vcvt.s32.f32 %v530
    %v595 = vcvt.s32.f32 %v531
    %v596 = vcvt.s32.f32 %v532
    %v597 = vcvt.s32.f32 %v533
    %v598 = vcvt.s32.f32 %v534
    %v599 = vcvt.s32.f32 %v535
    %v600 = vcvt.s32.f32 %v536
    %v601 = vcvt.s32.f32 %v537
    %v602 = vcvt.s32.f32 %v538
    %v603 = vcvt.s32.f32 %v539
    %v604 = vcvt.s32.f32 %v540
    %v605 = vcvt.s32.f32 %v541
    %v606 = vcvt.s32.f32 %v542
    %v607 = vcvt.s32.f32 %v543
    %v608 = vcvt.s32.f32 %v544
    %v609 = vcvt.s32.f32 %v545
    %v610 = vcvt.s32.f32 %v546
    %v611 = vcvt.s32.f32 %v547
    %v612 = vcvt.s32.f32 %v548
    %v613 = vcvt.s32.f32 %v549
    %v614 = vld [vmem:[%s1] sm:$0xff]
    %v615 = vld [vmem:[%s1 + $0x8] sm:$0xff]
    %v616 = vld [vmem:[%s1 + $0x10] sm:$0xff]
    %v617 = vld [vmem:[%s1 + $0x18] sm:$0xff]
    %v618 = vld [vmem:[%s1 + $0x20] sm:$0xff]
    %v619 = vld [vmem:[%s1 + $0x28] sm:$0xff]
    %v620 = vld [vmem:[%s1 + $0x30] sm:$0xff]
    %v621 = vld [vmem:[%s1 + $0x38] sm:$0xff]
    %v622 = vld [vmem:[%s1 + $0x40] sm:$0xff]
    %v623 = vld [vmem:[%s1 + $0x48] sm:$0xff]
    %v624 = vld [vmem:[%s1 + $0x50] sm:$0xff]
    %v625 = vld [vmem:[%s1 + $0x58] sm:$0xff]
    %v626 = vld [vmem:[%s1 + $0x60] sm:$0xff]
    %v627 = vld [vmem:[%s1 + $0x68] sm:$0xff]
    %v628 = vld [vmem:[%s1 + $0x70] sm:$0xff]
    %v629 = vld [vmem:[%s1 + $0x78] sm:$0xff]
    %v630 = vld [vmem:[%s1 + $0x80] sm:$0xff]
    %v631 = vld [vmem:[%s1 + $0x88] sm:$0xff]
    %v632 = vld [vmem:[%s1 + $0x90] sm:$0xff]
    %v633 = vld [vmem:[%s1 + $0x98] sm:$0xff]
    %v634 = vld [vmem:[%s1 + $0xa0] sm:$0xff]
    %v635 = vld [vmem:[%s1 + $0xa8] sm:$0xff]
    %v636 = vld [vmem:[%s1 + $0xb0] sm:$0xff]
    %v637 = vld [vmem:[%s1 + $0xb8] sm:$0xff]
    %v638 = vld [vmem:[%s1 + $0xc0] sm:$0xff]
    %v639 = vld [vmem:[%s1 + $0xc8] sm:$0xff]
    %v640 = vld [vmem:[%s1 + $0xd0] sm:$0xff]
    %v641 = vld [vmem:[%s1 + $0xd8] sm:$0xff]
    %v642 = vld [vmem:[%s1 + $0xe0] sm:$0xff]
    %v643 = vld [vmem:[%s1 + $0xe8] sm:$0xff]
    %v644 = vld [vmem:[%s1 + $0xf0] sm:$0xff]
    %v645 = vld [vmem:[%s1 + $0xf8] sm:$0xff]
    %v646 = vld [vmem:[%s2] sm:$0x1]
    %v648 = vlaneseq
    %v649 = vshrl.u32 %v648, 7
    %v650 = vsub.s32 0, %v649
    %v651 = vrot.slane %v646, %v650
    %653 = vmatprep.subr.mxu0 0.0
    %654 = vmatpush1.msra.mxu0 %v614
    %655 = vmatprep.subr.mxu0 0.0
    %656 = vmatpush1.msra.mxu0 %v615
    %657 = vmatprep.subr.mxu0 0.0
    %658 = vmatpush1.msra.mxu0 %v616
    %659 = vmatprep.subr.mxu0 0.0
    %660 = vmatpush1.msra.mxu0 %v617
    %661 = vmatprep.subr.mxu0 0.0
    %662 = vmatpush1.msra.mxu0 %v618
    %663 = vmatprep.subr.mxu0 0.0
    %664 = vmatpush1.msra.mxu0 %v619
    %665 = vmatprep.subr.mxu0 0.0
    %666 = vmatpush1.msra.mxu0 %v620
    %667 = vmatprep.subr.mxu0 0.0
    %668 = vmatpush1.msra.mxu0 %v621
    %669 = vmatprep.subr.mxu0 0.0
    %670 = vmatpush1.msra.mxu0 %v622
    %671 = vmatprep.subr.mxu0 0.0
    %672 = vmatpush1.msra.mxu0 %v623
    %673 = vmatprep.subr.mxu0 0.0
    %674 = vmatpush1.msra.mxu0 %v624
    %675 = vmatprep.subr.mxu0 0.0
    %676 = vmatpush1.msra.mxu0 %v625
    %677 = vmatprep.subr.mxu0 0.0
    %678 = vmatpush1.msra.mxu0 %v626
    %679 = vmatprep.subr.mxu0 0.0
    %680 = vmatpush1.msra.mxu0 %v627
    %681 = vmatprep.subr.mxu0 0.0
    %682 = vmatpush1.msra.mxu0 %v628
    %683 = vmatprep.subr.mxu0 0.0
    %684 = vmatpush1.msra.mxu0 %v629
    %685 = vmatprep.subr.mxu0 0.0
    %686 = vmatpush1.msra.mxu0 %v630
    %687 = vmatprep.subr.mxu0 0.0
    %688 = vmatpush1.msra.mxu0 %v631
    %689 = vmatprep.subr.mxu0 0.0
    %690 = vmatpush1.msra.mxu0 %v632
    %691 = vmatprep.subr.mxu0 0.0
    %692 = vmatpush1.msra.mxu0 %v633
    %693 = vmatprep.subr.mxu0 0.0
    %694 = vmatpush1.msra.mxu0 %v634
    %695 = vmatprep.subr.mxu0 0.0
    %696 = vmatpush1.msra.mxu0 %v635
    %697 = vmatprep.subr.mxu0 0.0
    %698 = vmatpush1.msra.mxu0 %v636
    %699 = vmatprep.subr.mxu0 0.0
    %700 = vmatpush1.msra.mxu0 %v637
    %701 = vmatprep.subr.mxu0 0.0
    %702 = vmatpush1.msra.mxu0 %v638
    %703 = vmatprep.subr.mxu0 0.0
    %704 = vmatpush1.msra.mxu0 %v639
    %705 = vmatprep.subr.mxu0 0.0
    %706 = vmatpush1.msra.mxu0 %v640
    %707 = vmatprep.subr.mxu0 0.0
    %708 = vmatpush1.msra.mxu0 %v641
    %709 = vmatprep.subr.mxu0 0.0
    %710 = vmatpush1.msra.mxu0 %v642
    %711 = vmatprep.subr.mxu0 0.0
    %712 = vmatpush1.msra.mxu0 %v643
    %713 = vmatprep.subr.mxu0 0.0
    %714 = vmatpush1.msra.mxu0 %v644
    %715 = vmatprep.subr.mxu0 0.0
    %716 = vmatpush1.msra.mxu0 %v645
    %717 = vmatprep.mubr.f32.mxu0 %v551
    %718 = vmatmul.mubr.f32.gmra.mrb[0].mxu0 %v550
    %v719 = vpop.f32.mrb[0].mxu0
    %v720 = vadd.f32 %v651, %v719
    %v721 = vpop.f32.mrb[0].mxu0
    %722 = vmatprep.mubr.f32.mxu0 %v553
    %723 = vmatmul.mubr.f32.gmra.mrb[0].mxu0 %v552
    %v724 = vpop.f32.mrb[0].mxu0
    %v725 = vadd.f32 %v651, %v724
    %v726 = vpop.f32.mrb[0].mxu0
    %727 = vmatprep.mubr.f32.mxu0 %v555
    %728 = vmatmul.mubr.f32.gmra.mrb[0].mxu0 %v554
    %v729 = vpop.f32.mrb[0].mxu0
    %v730 = vadd.f32 %v651, %v729
    %v731 = vpop.f32.mrb[0].mxu0
    %732 = vmatprep.mubr.f32.mxu0 %v557
    %733 = vmatmul.mubr.f32.gmra.mrb[0].mxu0 %v556
    %v734 = vpop.f32.mrb[0].mxu0
    %v735 = vadd.f32 %v651, %v734
    %v736 = vpop.f32.mrb[0].mxu0
    %737 = vmatprep.mubr.f32.mxu0 %v559
    %738 = vmatmul.mubr.f32.gmra.mrb[0].mxu0 %v558
    %v739 = vpop.f32.mrb[0].mxu0
    %v740 = vadd.f32 %v651, %v739
    %v741 = vpop.f32.mrb[0].mxu0
    %742 = vmatprep.mubr.f32.mxu0 %v561
    %743 = vmatmul.mubr.f32.gmra.mrb[0].mxu0 %v560
    %v744 = vpop.f32.mrb[0].mxu0
    %v745 = vadd.f32 %v651, %v744
    %v746 = vpop.f32.mrb[0].mxu0
    %747 = vmatprep.mubr.f32.mxu0 %v563
    %748 = vmatmul.mubr.f32.gmra.mrb[0].mxu0 %v562
    %v749 = vpop.f32.mrb[0].mxu0
    %v750 = vadd.f32 %v651, %v749
    %v751 = vpop.f32.mrb[0].mxu0
    %752 = vmatprep.mubr.f32.mxu0 %v565
    %753 = vmatmul.mubr.f32.gmra.mrb[0].mxu0 %v564
    %v754 = vpop.f32.mrb[0].mxu0
    %v755 = vadd.f32 %v651, %v754
    %v756 = vpop.f32.mrb[0].mxu0
    %757 = vmatprep.mubr.f32.mxu0 %v567
    %758 = vmatmul.mubr.f32.gmra.mrb[0].mxu0 %v566
    %v759 = vpop.f32.mrb[0].mxu0
    %v760 = vadd.f32 %v651, %v759
    %v761 = vpop.f32.mrb[0].mxu0
    %762 = vmatprep.mubr.f32.mxu0 %v569
    %763 = vmatmul.mubr.f32.gmra.mrb[0].mxu0 %v568
    %v764 = vpop.f32.mrb[0].mxu0
    %v765 = vadd.f32 %v651, %v764
    %v766 = vpop.f32.mrb[0].mxu0
    %767 = vmatprep.mubr.f32.mxu0 %v571
    %768 = vmatmul.mubr.f32.gmra.mrb[0].mxu0 %v570
    %v769 = vpop.f32.mrb[0].mxu0
    %v770 = vadd.f32 %v651, %v769
    %v771 = vpop.f32.mrb[0].mxu0
    %772 = vmatprep.mubr.f32.mxu0 %v573
    %773 = vmatmul.mubr.f32.gmra.mrb[0].mxu0 %v572
    %v774 = vpop.f32.mrb[0].mxu0
    %v775 = vadd.f32 %v651, %v774
    %v776 = vpop.f32.mrb[0].mxu0
    %777 = vmatprep.mubr.f32.mxu0 %v575
    %778 = vmatmul.mubr.f32.gmra.mrb[0].mxu0 %v574
    %v779 = vpop.f32.mrb[0].mxu0
    %v780 = vadd.f32 %v651, %v779
    %v781 = vpop.f32.mrb[0].mxu0
    %782 = vmatprep.mubr.f32.mxu0 %v577
    %783 = vmatmul.mubr.f32.gmra.mrb[0].mxu0 %v576
    %v784 = vpop.f32.mrb[0].mxu0
    %v785 = vadd.f32 %v651, %v784
    %v786 = vpop.f32.mrb[0].mxu0
    %787 = vmatprep.mubr.f32.mxu0 %v579
    %788 = vmatmul.mubr.f32.gmra.mrb[0].mxu0 %v578
    %v789 = vpop.f32.mrb[0].mxu0
    %v790 = vadd.f32 %v651, %v789
    %v791 = vpop.f32.mrb[0].mxu0
    %792 = vmatprep.mubr.f32.mxu0 %v581
    %793 = vmatmul.mubr.f32.gmra.mrb[0].mxu0 %v580
    %v794 = vpop.f32.mrb[0].mxu0
    %v795 = vadd.f32 %v651, %v794
    %v796 = vpop.f32.mrb[0].mxu0
    %797 = vmatprep.mubr.f32.mxu0 %v583
    %798 = vmatmul.mubr.f32.gmra.mrb[0].mxu0 %v582
    %v799 = vpop.f32.mrb[0].mxu0
    %v800 = vadd.f32 %v651, %v799
    %v801 = vpop.f32.mrb[0].mxu0
    %802 = vmatprep.mubr.f32.mxu0 %v585
    %803 = vmatmul.mubr.f32.gmra.mrb[0].mxu0 %v584
    %v804 = vpop.f32.mrb[0].mxu0
    %v805 = vadd.f32 %v651, %v804
    %v806 = vpop.f32.mrb[0].mxu0
    %807 = vmatprep.mubr.f32.mxu0 %v587
    %808 = vmatmul.mubr.f32.gmra.mrb[0].mxu0 %v586
    %v809 = vpop.f32.mrb[0].mxu0
    %v810 = vadd.f32 %v651, %v809
    %v811 = vpop.f32.mrb[0].mxu0
    %812 = vmatprep.mubr.f32.mxu0 %v589
    %813 = vmatmul.mubr.f32.gmra.mrb[0].mxu0 %v588
    %v814 = vpop.f32.mrb[0].mxu0
    %v815 = vadd.f32 %v651, %v814
    %v816 = vpop.f32.mrb[0].mxu0
    %817 = vmatprep.mubr.f32.mxu0 %v591
    %818 = vmatmul.mubr.f32.gmra.mrb[0].mxu0 %v590
    %v819 = vpop.f32.mrb[0].mxu0
    %v820 = vadd.f32 %v651, %v819
    %v821 = vpop.f32.mrb[0].mxu0
    %822 = vmatprep.mubr.f32.mxu0 %v593
    %823 = vmatmul.mubr.f32.gmra.mrb[0].mxu0 %v592
    %v824 = vpop.f32.mrb[0].mxu0
    %v825 = vadd.f32 %v651, %v824
    %v826 = vpop.f32.mrb[0].mxu0
    %827 = vmatprep.mubr.f32.mxu0 %v595
    %828 = vmatmul.mubr.f32.gmra.mrb[0].mxu0 %v594
    %v829 = vpop.f32.mrb[0].mxu0
    %v830 = vadd.f32 %v651, %v829
    %v831 = vpop.f32.mrb[0].mxu0
    %832 = vmatprep.mubr.f32.mxu0 %v597
    %833 = vmatmul.mubr.f32.gmra.mrb[0].mxu0 %v596
    %v834 = vpop.f32.mrb[0].mxu0
    %v835 = vadd.f32 %v651, %v834
    %v836 = vpop.f32.mrb[0].mxu0
    %837 = vmatprep.mubr.f32.mxu0 %v599
    %838 = vmatmul.mubr.f32.gmra.mrb[0].mxu0 %v598
    %v839 = vpop.f32.mrb[0].mxu0
    %v840 = vadd.f32 %v651, %v839
    %v841 = vpop.f32.mrb[0].mxu0
    %842 = vmatprep.mubr.f32.mxu0 %v601
    %843 = vmatmul.mubr.f32.gmra.mrb[0].mxu0 %v600
    %v844 = vpop.f32.mrb[0].mxu0
    %v845 = vadd.f32 %v651, %v844
    %v846 = vpop.f32.mrb[0].mxu0
    %847 = vmatprep.mubr.f32.mxu0 %v603
    %848 = vmatmul.mubr.f32.gmra.mrb[0].mxu0 %v602
    %v849 = vpop.f32.mrb[0].mxu0
    %v850 = vadd.f32 %v651, %v849
    %v851 = vpop.f32.mrb[0].mxu0
    %852 = vmatprep.mubr.f32.mxu0 %v605
    %853 = vmatmul.mubr.f32.gmra.mrb[0].mxu0 %v604
    %v854 = vpop.f32.mrb[0].mxu0
    %v855 = vadd.f32 %v651, %v854
    %v856 = vpop.f32.mrb[0].mxu0
    %857 = vmatprep.mubr.f32.mxu0 %v607
    %858 = vmatmul.mubr.f32.gmra.mrb[0].mxu0 %v606
    %v859 = vpop.f32.mrb[0].mxu0
    %v860 = vadd.f32 %v651, %v859
    %v861 = vpop.f32.mrb[0].mxu0
    %862 = vmatprep.mubr.f32.mxu0 %v609
    %863 = vmatmul.mubr.f32.gmra.mrb[0].mxu0 %v608
    %v864 = vpop.f32.mrb[0].mxu0
    %v865 = vadd.f32 %v651, %v864
    %v866 = vpop.f32.mrb[0].mxu0
    %867 = vmatprep.mubr.f32.mxu0 %v611
    %868 = vmatmul.mubr.f32.gmra.mrb[0].mxu0 %v610
    %v869 = vpop.f32.mrb[0].mxu0
    %v870 = vadd.f32 %v651, %v869
    %v871 = vpop.f32.mrb[0].mxu0
    %872 = vmatprep.mubr.f32.mxu0 %v613
    %873 = vmatmul.mubr.f32.gmra.mrb[0].mxu0 %v612
    %v874 = vpop.f32.mrb[0].mxu0
    %v875 = vadd.f32 %v651, %v874
    %v876 = vpop.f32.mrb[0].mxu0
    %877 = vdwg.mxu0
    %v878 = vmax.f32 %v720, 0.0
    %v879 = vmax.f32 %v725, 0.0
    %v880 = vmax.f32 %v730, 0.0
    %v881 = vmax.f32 %v735, 0.0
    %v882 = vmax.f32 %v740, 0.0
    %v883 = vmax.f32 %v745, 0.0
    %v884 = vmax.f32 %v750, 0.0
    %v885 = vmax.f32 %v755, 0.0
    %v886 = vmax.f32 %v760, 0.0
    %v887 = vmax.f32 %v765, 0.0
    %v888 = vmax.f32 %v770, 0.0
    %v889 = vmax.f32 %v775, 0.0
    %v890 = vmax.f32 %v780, 0.0
    %v891 = vmax.f32 %v785, 0.0
    %v892 = vmax.f32 %v790, 0.0
    %v893 = vmax.f32 %v795, 0.0
    %v894 = vmax.f32 %v800, 0.0
    %v895 = vmax.f32 %v805, 0.0
    %v896 = vmax.f32 %v810, 0.0
    %v897 = vmax.f32 %v815, 0.0
    %v898 = vmax.f32 %v820, 0.0
    %v899 = vmax.f32 %v825, 0.0
    %v900 = vmax.f32 %v830, 0.0
    %v901 = vmax.f32 %v835, 0.0
    %v902 = vmax.f32 %v840, 0.0
    %v903 = vmax.f32 %v845, 0.0
    %v904 = vmax.f32 %v850, 0.0
    %v905 = vmax.f32 %v855, 0.0
    %v906 = vmax.f32 %v860, 0.0
    %v907 = vmax.f32 %v865, 0.0
    %v908 = vmax.f32 %v870, 0.0
    %v909 = vmax.f32 %v875, 0.0
    %v910 = vld [vmem:[#allocation2] sm:$0xff]
    %v911 = vld [vmem:[#allocation2 + $0x8] sm:$0xff]
    %v912 = vld [vmem:[#allocation2 + $0x10] sm:$0xff]
    %v913 = vld [vmem:[#allocation2 + $0x18] sm:$0xff]
    %v914 = vld [vmem:[#allocation2 + $0x20] sm:$0xff]
    %v915 = vld [vmem:[#allocation2 + $0x28] sm:$0xff]
    %v916 = vld [vmem:[#allocation2 + $0x30] sm:$0xff]
    %v917 = vld [vmem:[#allocation2 + $0x38] sm:$0xff]
    %v918 = vld [vmem:[#allocation2 + $0x40] sm:$0xff]
    %v919 = vld [vmem:[#allocation2 + $0x48] sm:$0xff]
    %v920 = vld [vmem:[#allocation2 + $0x50] sm:$0xff]
    %v921 = vld [vmem:[#allocation2 + $0x58] sm:$0xff]
    %v922 = vld [vmem:[#allocation2 + $0x60] sm:$0xff]
    %v923 = vld [vmem:[#allocation2 + $0x68] sm:$0xff]
    %v924 = vld [vmem:[#allocation2 + $0x70] sm:$0xff]
    %v925 = vld [vmem:[#allocation2 + $0x78] sm:$0xff]
    %v926 = vld [vmem:[%s4] sm:$0x1]
    %v928 = vlaneseq
    %v929 = vshrl.u32 %v928, 7
    %v930 = vsub.s32 0, %v929
    %v931 = vrot.slane %v926, %v930
    %933 = vmatprep.subr.mxu0 0.0
    %934 = vmatpush1.msra.mxu0 %v910
    %935 = vmatprep.subr.mxu0 0.0
    %936 = vmatpush1.msra.mxu0 %v911
    %937 = vmatprep.subr.mxu0 0.0
    %938 = vmatpush1.msra.mxu0 %v912
    %939 = vmatprep.subr.mxu0 0.0
    %940 = vmatpush1.msra.mxu0 %v913
    %941 = vmatprep.subr.mxu0 0.0
    %942 = vmatpush1.msra.mxu0 %v914
    %943 = vmatprep.subr.mxu0 0.0
    %944 = vmatpush1.msra.mxu0 %v915
    %945 = vmatprep.subr.mxu0 0.0
    %946 = vmatpush1.msra.mxu0 %v916
    %947 = vmatprep.subr.mxu0 0.0
    %948 = vmatpush1.msra.mxu0 %v917
    %949 = vmatprep.subr.mxu0 0.0
    %950 = vmatpush1.msra.mxu0 %v918
    %951 = vmatprep.subr.mxu0 0.0
    %952 = vmatpush1.msra.mxu0 %v919
    %953 = vmatprep.subr.mxu0 0.0
    %954 = vmatpush1.msra.mxu0 %v920
    %955 = vmatprep.subr.mxu0 0.0
    %956 = vmatpush1.msra.mxu0 %v921
    %957 = vmatprep.subr.mxu0 0.0
    %958 = vmatpush1.msra.mxu0 %v922
    %959 = vmatprep.subr.mxu0 0.0
    %960 = vmatpush1.msra.mxu0 %v923
    %961 = vmatprep.subr.mxu0 0.0
    %962 = vmatpush1.msra.mxu0 %v924
    %963 = vmatprep.subr.mxu0 0.0
    %964 = vmatpush1.msra.mxu0 %v925
    %965 = vmatprep.subr.mxu0 0.0
    %966 = vmatpush1.msra.mxu0 0.0
    %967 = vmatprep.subr.mxu0 0.0
    %968 = vmatpush1.msra.mxu0 0.0
    %969 = vmatprep.subr.mxu0 0.0
    %970 = vmatpush1.msra.mxu0 0.0
    %971 = vmatprep.subr.mxu0 0.0
    %972 = vmatpush1.msra.mxu0 0.0
    %973 = vmatprep.subr.mxu0 0.0
    %974 = vmatpush1.msra.mxu0 0.0
    %975 = vmatprep.subr.mxu0 0.0
    %976 = vmatpush1.msra.mxu0 0.0
    %977 = vmatprep.subr.mxu0 0.0
    %978 = vmatpush1.msra.mxu0 0.0
    %979 = vmatprep.subr.mxu0 0.0
    %980 = vmatpush1.msra.mxu0 0.0
    %981 = vmatprep.subr.mxu0 0.0
    %982 = vmatpush1.msra.mxu0 0.0
    %983 = vmatprep.subr.mxu0 0.0
    %984 = vmatpush1.msra.mxu0 0.0
    %985 = vmatprep.subr.mxu0 0.0
    %986 = vmatpush1.msra.mxu0 0.0
    %987 = vmatprep.subr.mxu0 0.0
    %988 = vmatpush1.msra.mxu0 0.0
    %989 = vmatprep.subr.mxu0 0.0
    %990 = vmatpush1.msra.mxu0 0.0
    %991 = vmatprep.subr.mxu0 0.0
    %992 = vmatpush1.msra.mxu0 0.0
    %993 = vmatprep.subr.mxu0 0.0
    %994 = vmatpush1.msra.mxu0 0.0
    %995 = vmatprep.subr.mxu0 0.0
    %996 = vmatpush1.msra.mxu0 0.0
    %997 = vmatprep.mubr.f32.mxu0 0.0
    %998 = vmatmul.mubr.f32.gmra.mrb[0].mxu0 %v878
    %v999 = vpop.f32.mrb[0].mxu0
    %v1000 = vadd.f32 %v931, %v999
    %v1001 = vpop.f32.mrb[0].mxu0
    %1002 = vmatprep.mubr.f32.mxu0 0.0
    %1003 = vmatmul.mubr.f32.gmra.mrb[0].mxu0 %v879
    %v1004 = vpop.f32.mrb[0].mxu0
    %v1005 = vadd.f32 %v931, %v1004
    %v1006 = vpop.f32.mrb[0].mxu0
    %1007 = vmatprep.mubr.f32.mxu0 0.0
    %1008 = vmatmul.mubr.f32.gmra.mrb[0].mxu0 %v880
    %v1009 = vpop.f32.mrb[0].mxu0
    %v1010 = vadd.f32 %v931, %v1009
    %v1011 = vpop.f32.mrb[0].mxu0
    %1012 = vmatprep.mubr.f32.mxu0 0.0
    %1013 = vmatmul.mubr.f32.gmra.mrb[0].mxu0 %v881
    %v1014 = vpop.f32.mrb[0].mxu0
    %v1015 = vadd.f32 %v931, %v1014
    %v1016 = vpop.f32.mrb[0].mxu0
    %1017 = vmatprep.mubr.f32.mxu0 0.0
    %1018 = vmatmul.mubr.f32.gmra.mrb[0].mxu0 %v882
    %v1019 = vpop.f32.mrb[0].mxu0
    %v1020 = vadd.f32 %v931, %v1019
    %v1021 = vpop.f32.mrb[0].mxu0
    %1022 = vmatprep.mubr.f32.mxu0 0.0
    %1023 = vmatmul.mubr.f32.gmra.mrb[0].mxu0 %v883
    %v1024 = vpop.f32.mrb[0].mxu0
    %v1025 = vadd.f32 %v931, %v1024
    %v1026 = vpop.f32.mrb[0].mxu0
    %1027 = vmatprep.mubr.f32.mxu0 0.0
    %1028 = vmatmul.mubr.f32.gmra.mrb[0].mxu0 %v884
    %v1029 = vpop.f32.mrb[0].mxu0
    %v1030 = vadd.f32 %v931, %v1029
    %v1031 = vpop.f32.mrb[0].mxu0
    %1032 = vmatprep.mubr.f32.mxu0 0.0
    %1033 = vmatmul.mubr.f32.gmra.mrb[0].mxu0 %v885
    %v1034 = vpop.f32.mrb[0].mxu0
    %v1035 = vadd.f32 %v931, %v1034
    %v1036 = vpop.f32.mrb[0].mxu0
    %1037 = vmatprep.mubr.f32.mxu0 0.0
    %1038 = vmatmul.mubr.f32.gmra.mrb[0].mxu0 %v886
    %v1039 = vpop.f32.mrb[0].mxu0
    %v1040 = vadd.f32 %v931, %v1039
    %v1041 = vpop.f32.mrb[0].mxu0
    %1042 = vmatprep.mubr.f32.mxu0 0.0
    %1043 = vmatmul.mubr.f32.gmra.mrb[0].mxu0 %v887
    %v1044 = vpop.f32.mrb[0].mxu0
    %v1045 = vadd.f32 %v931, %v1044
    %v1046 = vpop.f32.mrb[0].mxu0
    %1047 = vmatprep.mubr.f32.mxu0 0.0
    %1048 = vmatmul.mubr.f32.gmra.mrb[0].mxu0 %v888
    %v1049 = vpop.f32.mrb[0].mxu0
    %v1050 = vadd.f32 %v931, %v1049
    %v1051 = vpop.f32.mrb[0].mxu0
    %1052 = vmatprep.mubr.f32.mxu0 0.0
    %1053 = vmatmul.mubr.f32.gmra.mrb[0].mxu0 %v889
    %v1054 = vpop.f32.mrb[0].mxu0
    %v1055 = vadd.f32 %v931, %v1054
    %v1056 = vpop.f32.mrb[0].mxu0
    %1057 = vmatprep.mubr.f32.mxu0 0.0
    %1058 = vmatmul.mubr.f32.gmra.mrb[0].mxu0 %v890
    %v1059 = vpop.f32.mrb[0].mxu0
    %v1060 = vadd.f32 %v931, %v1059
    %v1061 = vpop.f32.mrb[0].mxu0
    %1062 = vmatprep.mubr.f32.mxu0 0.0
    %1063 = vmatmul.mubr.f32.gmra.mrb[0].mxu0 %v891
    %v1064 = vpop.f32.mrb[0].mxu0
    %v1065 = vadd.f32 %v931, %v1064
    %v1066 = vpop.f32.mrb[0].mxu0
    %1067 = vmatprep.mubr.f32.mxu0 0.0
    %1068 = vmatmul.mubr.f32.gmra.mrb[0].mxu0 %v892
    %v1069 = vpop.f32.mrb[0].mxu0
    %v1070 = vadd.f32 %v931, %v1069
    %v1071 = vpop.f32.mrb[0].mxu0
    %1072 = vmatprep.mubr.f32.mxu0 0.0
    %1073 = vmatmul.mubr.f32.gmra.mrb[0].mxu0 %v893
    %v1074 = vpop.f32.mrb[0].mxu0
    %v1075 = vadd.f32 %v931, %v1074
    %v1076 = vpop.f32.mrb[0].mxu0
    %1077 = vmatprep.mubr.f32.mxu0 0.0
    %1078 = vmatmul.mubr.f32.gmra.mrb[0].mxu0 %v894
    %v1079 = vpop.f32.mrb[0].mxu0
    %v1080 = vadd.f32 %v931, %v1079
    %v1081 = vpop.f32.mrb[0].mxu0
    %1082 = vmatprep.mubr.f32.mxu0 0.0
    %1083 = vmatmul.mubr.f32.gmra.mrb[0].mxu0 %v895
    %v1084 = vpop.f32.mrb[0].mxu0
    %v1085 = vadd.f32 %v931, %v1084
    %v1086 = vpop.f32.mrb[0].mxu0
    %1087 = vmatprep.mubr.f32.mxu0 0.0
    %1088 = vmatmul.mubr.f32.gmra.mrb[0].mxu0 %v896
    %v1089 = vpop.f32.mrb[0].mxu0
    %v1090 = vadd.f32 %v931, %v1089
    %v1091 = vpop.f32.mrb[0].mxu0
    %1092 = vmatprep.mubr.f32.mxu0 0.0
    %1093 = vmatmul.mubr.f32.gmra.mrb[0].mxu0 %v897
    %v1094 = vpop.f32.mrb[0].mxu0
    %v1095 = vadd.f32 %v931, %v1094
    %v1096 = vpop.f32.mrb[0].mxu0
    %1097 = vmatprep.mubr.f32.mxu0 0.0
    %1098 = vmatmul.mubr.f32.gmra.mrb[0].mxu0 %v898
    %v1099 = vpop.f32.mrb[0].mxu0
    %v1100 = vadd.f32 %v931, %v1099
    %v1101 = vpop.f32.mrb[0].mxu0
    %1102 = vmatprep.mubr.f32.mxu0 0.0
    %1103 = vmatmul.mubr.f32.gmra.mrb[0].mxu0 %v899
    %v1104 = vpop.f32.mrb[0].mxu0
    %v1105 = vadd.f32 %v931, %v1104
    %v1106 = vpop.f32.mrb[0].mxu0
    %1107 = vmatprep.mubr.f32.mxu0 0.0
    %1108 = vmatmul.mubr.f32.gmra.mrb[0].mxu0 %v900
    %v1109 = vpop.f32.mrb[0].mxu0
    %v1110 = vadd.f32 %v931, %v1109
    %v1111 = vpop.f32.mrb[0].mxu0
    %1112 = vmatprep.mubr.f32.mxu0 0.0
    %1113 = vmatmul.mubr.f32.gmra.mrb[0].mxu0 %v901
    %v1114 = vpop.f32.mrb[0].mxu0
    %v1115 = vadd.f32 %v931, %v1114
    %v1116 = vpop.f32.mrb[0].mxu0
    %1117 = vmatprep.mubr.f32.mxu0 0.0
    %1118 = vmatmul.mubr.f32.gmra.mrb[0].mxu0 %v902
    %v1119 = vpop.f32.mrb[0].mxu0
    %v1120 = vadd.f32 %v931, %v1119
    %v1121 = vpop.f32.mrb[0].mxu0
    %1122 = vmatprep.mubr.f32.mxu0 0.0
    %1123 = vmatmul.mubr.f32.gmra.mrb[0].mxu0 %v903
    %v1124 = vpop.f32.mrb[0].mxu0
    %v1125 = vadd.f32 %v931, %v1124
    %v1126 = vpop.f32.mrb[0].mxu0
    %1127 = vmatprep.mubr.f32.mxu0 0.0
    %1128 = vmatmul.mubr.f32.gmra.mrb[0].mxu0 %v904
    %v1129 = vpop.f32.mrb[0].mxu0
    %v1130 = vadd.f32 %v931, %v1129
    %v1131 = vpop.f32.mrb[0].mxu0
    %1132 = vmatprep.mubr.f32.mxu0 0.0
    %1133 = vmatmul.mubr.f32.gmra.mrb[0].mxu0 %v905
    %v1134 = vpop.f32.mrb[0].mxu0
    %v1135 = vadd.f32 %v931, %v1134
    %v1136 = vpop.f32.mrb[0].mxu0
    %1137 = vmatprep.mubr.f32.mxu0 0.0
    %1138 = vmatmul.mubr.f32.gmra.mrb[0].mxu0 %v906
    %v1139 = vpop.f32.mrb[0].mxu0
    %v1140 = vadd.f32 %v931, %v1139
    %v1141 = vpop.f32.mrb[0].mxu0
    %1142 = vmatprep.mubr.f32.mxu0 0.0
    %1143 = vmatmul.mubr.f32.gmra.mrb[0].mxu0 %v907
    %v1144 = vpop.f32.mrb[0].mxu0
    %v1145 = vadd.f32 %v931, %v1144
    %v1146 = vpop.f32.mrb[0].mxu0
    %1147 = vmatprep.mubr.f32.mxu0 0.0
    %1148 = vmatmul.mubr.f32.gmra.mrb[0].mxu0 %v908
    %v1149 = vpop.f32.mrb[0].mxu0
    %v1150 = vadd.f32 %v931, %v1149
    %v1151 = vpop.f32.mrb[0].mxu0
    %1152 = vmatprep.mubr.f32.mxu0 0.0
    %1153 = vmatmul.mubr.f32.gmra.mrb[0].mxu0 %v909
    %v1154 = vpop.f32.mrb[0].mxu0
    %v1155 = vadd.f32 %v931, %v1154
    %v1156 = vpop.f32.mrb[0].mxu0
    %1157 = vdwg.mxu0
    %1158 = vmax.xlane.f32.xlu0 %v1000
    %v1159 = vpop.xlane.xlu0 %1158
    %1160 = vmax.xlane.f32.xlu0 %v1005
    %v1161 = vpop.xlane.xlu0 %1160
    %1162 = vmax.xlane.f32.xlu0 %v1010
    %v1163 = vpop.xlane.xlu0 %1162
    %1164 = vmax.xlane.f32.xlu0 %v1015
    %v1165 = vpop.xlane.xlu0 %1164
    %1166 = vmax.xlane.f32.xlu0 %v1020
    %v1167 = vpop.xlane.xlu0 %1166
    %1168 = vmax.xlane.f32.xlu0 %v1025
    %v1169 = vpop.xlane.xlu0 %1168
    %1170 = vmax.xlane.f32.xlu0 %v1030
    %v1171 = vpop.xlane.xlu0 %1170
    %1172 = vmax.xlane.f32.xlu0 %v1035
    %v1173 = vpop.xlane.xlu0 %1172
    %1174 = vmax.xlane.f32.xlu0 %v1040
    %v1175 = vpop.xlane.xlu0 %1174
    %1176 = vmax.xlane.f32.xlu0 %v1045
    %v1177 = vpop.xlane.xlu0 %1176
    %1178 = vmax.xlane.f32.xlu0 %v1050
    %v1179 = vpop.xlane.xlu0 %1178
    %1180 = vmax.xlane.f32.xlu0 %v1055
    %v1181 = vpop.xlane.xlu0 %1180
    %1182 = vmax.xlane.f32.xlu0 %v1060
    %v1183 = vpop.xlane.xlu0 %1182
    %1184 = vmax.xlane.f32.xlu0 %v1065
    %v1185 = vpop.xlane.xlu0 %1184
    %1186 = vmax.xlane.f32.xlu0 %v1070
    %v1187 = vpop.xlane.xlu0 %1186
    %1188 = vmax.xlane.f32.xlu0 %v1075
    %v1189 = vpop.xlane.xlu0 %1188
    %1190 = vmax.xlane.f32.xlu0 %v1080
    %v1191 = vpop.xlane.xlu0 %1190
    %1192 = vmax.xlane.f32.xlu0 %v1085
    %v1193 = vpop.xlane.xlu0 %1192
    %1194 = vmax.xlane.f32.xlu0 %v1090
    %v1195 = vpop.xlane.xlu0 %1194
    %1196 = vmax.xlane.f32.xlu0 %v1095
    %v1197 = vpop.xlane.xlu0 %1196
    %1198 = vmax.xlane.f32.xlu0 %v1100
    %v1199 = vpop.xlane.xlu0 %1198
    %1200 = vmax.xlane.f32.xlu0 %v1105
    %v1201 = vpop.xlane.xlu0 %1200
    %1202 = vmax.xlane.f32.xlu0 %v1110
    %v1203 = vpop.xlane.xlu0 %1202
    %1204 = vmax.xlane.f32.xlu0 %v1115
    %v1205 = vpop.xlane.xlu0 %1204
    %1206 = vmax.xlane.f32.xlu0 %v1120
    %v1207 = vpop.xlane.xlu0 %1206
    %1208 = vmax.xlane.f32.xlu0 %v1125
    %v1209 = vpop.xlane.xlu0 %1208
    %1210 = vmax.xlane.f32.xlu0 %v1130
    %v1211 = vpop.xlane.xlu0 %1210
    %1212 = vmax.xlane.f32.xlu0 %v1135
    %v1213 = vpop.xlane.xlu0 %1212
    %1214 = vmax.xlane.f32.xlu0 %v1140
    %v1215 = vpop.xlane.xlu0 %1214
    %1216 = vmax.xlane.f32.xlu0 %v1145
    %v1217 = vpop.xlane.xlu0 %1216
    %1218 = vmax.xlane.f32.xlu0 %v1150
    %v1219 = vpop.xlane.xlu0 %1218
    %1220 = vmax.xlane.f32.xlu0 %v1155
    %v1221 = vpop.xlane.xlu0 %1220
    %v1222 = vsub.f32 %v1000, %v1159
    %v1223 = vsub.f32 %v1005, %v1161
    %v1224 = vsub.f32 %v1010, %v1163
    %v1225 = vsub.f32 %v1015, %v1165
    %v1226 = vsub.f32 %v1020, %v1167
    %v1227 = vsub.f32 %v1025, %v1169
    %v1228 = vsub.f32 %v1030, %v1171
    %v1229 = vsub.f32 %v1035, %v1173
    %v1230 = vsub.f32 %v1040, %v1175
    %v1231 = vsub.f32 %v1045, %v1177
    %v1232 = vsub.f32 %v1050, %v1179
    %v1233 = vsub.f32 %v1055, %v1181
    %v1234 = vsub.f32 %v1060, %v1183
    %v1235 = vsub.f32 %v1065, %v1185
    %v1236 = vsub.f32 %v1070, %v1187
    %v1237 = vsub.f32 %v1075, %v1189
    %v1238 = vsub.f32 %v1080, %v1191
    %v1239 = vsub.f32 %v1085, %v1193
    %v1240 = vsub.f32 %v1090, %v1195
    %v1241 = vsub.f32 %v1095, %v1197
    %v1242 = vsub.f32 %v1100, %v1199
    %v1243 = vsub.f32 %v1105, %v1201
    %v1244 = vsub.f32 %v1110, %v1203
    %v1245 = vsub.f32 %v1115, %v1205
    %v1246 = vsub.f32 %v1120, %v1207
    %v1247 = vsub.f32 %v1125, %v1209
    %v1248 = vsub.f32 %v1130, %v1211
    %v1249 = vsub.f32 %v1135, %v1213
    %v1250 = vsub.f32 %v1140, %v1215
    %v1251 = vsub.f32 %v1145, %v1217
    %v1252 = vsub.f32 %v1150, %v1219
    %v1253 = vsub.f32 %v1155, %v1221
    %v1254 = vmul.f32 %v1222, 1.442695
    %v1255 = vpow.pop %v1254
    %v1256 = vmul.f32 %v1223, 1.442695
    %v1257 = vpow.pop %v1256
    %v1258 = vmul.f32 %v1224, 1.442695
    %v1259 = vpow.pop %v1258
    %v1260 = vmul.f32 %v1225, 1.442695
    %v1261 = vpow.pop %v1260
    %v1262 = vmul.f32 %v1226, 1.442695
    %v1263 = vpow.pop %v1262
    %v1264 = vmul.f32 %v1227, 1.442695
    %v1265 = vpow.pop %v1264
    %v1266 = vmul.f32 %v1228, 1.442695
    %v1267 = vpow.pop %v1266
    %v1268 = vmul.f32 %v1229, 1.442695
    %v1269 = vpow.pop %v1268
    %v1270 = vmul.f32 %v1230, 1.442695
    %v1271 = vpow.pop %v1270
    %v1272 = vmul.f32 %v1231, 1.442695
    %v1273 = vpow.pop %v1272
    %v1274 = vmul.f32 %v1232, 1.442695
    %v1275 = vpow.pop %v1274
    %v1276 = vmul.f32 %v1233, 1.442695
    %v1277 = vpow.pop %v1276
    %v1278 = vmul.f32 %v1234, 1.442695
    %v1279 = vpow.pop %v1278
    %v1280 = vmul.f32 %v1235, 1.442695
    %v1281 = vpow.pop %v1280
    %v1282 = vmul.f32 %v1236, 1.442695
    %v1283 = vpow.pop %v1282
    %v1284 = vmul.f32 %v1237, 1.442695
    %v1285 = vpow.pop %v1284
    %v1286 = vmul.f32 %v1238, 1.442695
    %v1287 = vpow.pop %v1286
    %v1288 = vmul.f32 %v1239, 1.442695
    %v1289 = vpow.pop %v1288
    %v1290 = vmul.f32 %v1240, 1.442695
    %v1291 = vpow.pop %v1290
    %v1292 = vmul.f32 %v1241, 1.442695
    %v1293 = vpow.pop %v1292
    %v1294 = vmul.f32 %v1242, 1.442695
    %v1295 = vpow.pop %v1294
    %v1296 = vmul.f32 %v1243, 1.442695
    %v1297 = vpow.pop %v1296
    %v1298 = vmul.f32 %v1244, 1.442695
    %v1299 = vpow.pop %v1298
    %v1300 = vmul.f32 %v1245, 1.442695
    %v1301 = vpow.pop %v1300
    %v1302 = vmul.f32 %v1246, 1.442695
    %v1303 = vpow.pop %v1302
    %v1304 = vmul.f32 %v1247, 1.442695
    %v1305 = vpow.pop %v1304
    %v1306 = vmul.f32 %v1248, 1.442695
    %v1307 = vpow.pop %v1306
    %v1308 = vmul.f32 %v1249, 1.442695
    %v1309 = vpow.pop %v1308
    %v1310 = vmul.f32 %v1250, 1.442695
    %v1311 = vpow.pop %v1310
    %v1312 = vmul.f32 %v1251, 1.442695
    %v1313 = vpow.pop %v1312
    %v1314 = vmul.f32 %v1252, 1.442695
    %v1315 = vpow.pop %v1314
    %v1316 = vmul.f32 %v1253, 1.442695
    %v1317 = vpow.pop %v1316
    %1318 = vadd.xlane.f32.xlu0 %v1255
    %v1319 = vpop.xlane.xlu0 %1318
    %1320 = vadd.xlane.f32.xlu0 %v1257
    %v1321 = vpop.xlane.xlu0 %1320
    %1322 = vadd.xlane.f32.xlu0 %v1259
    %v1323 = vpop.xlane.xlu0 %1322
    %1324 = vadd.xlane.f32.xlu0 %v1261
    %v1325 = vpop.xlane.xlu0 %1324
    %1326 = vadd.xlane.f32.xlu0 %v1263
    %v1327 = vpop.xlane.xlu0 %1326
    %1328 = vadd.xlane.f32.xlu0 %v1265
    %v1329 = vpop.xlane.xlu0 %1328
    %1330 = vadd.xlane.f32.xlu0 %v1267
    %v1331 = vpop.xlane.xlu0 %1330
    %1332 = vadd.xlane.f32.xlu0 %v1269
    %v1333 = vpop.xlane.xlu0 %1332
    %1334 = vadd.xlane.f32.xlu0 %v1271
    %v1335 = vpop.xlane.xlu0 %1334
    %1336 = vadd.xlane.f32.xlu0 %v1273
    %v1337 = vpop.xlane.xlu0 %1336
    %1338 = vadd.xlane.f32.xlu0 %v1275
    %v1339 = vpop.xlane.xlu0 %1338
    %1340 = vadd.xlane.f32.xlu0 %v1277
    %v1341 = vpop.xlane.xlu0 %1340
    %1342 = vadd.xlane.f32.xlu0 %v1279
    %v1343 = vpop.xlane.xlu0 %1342
    %1344 = vadd.xlane.f32.xlu0 %v1281
    %v1345 = vpop.xlane.xlu0 %1344
    %1346 = vadd.xlane.f32.xlu0 %v1283
    %v1347 = vpop.xlane.xlu0 %1346
    %1348 = vadd.xlane.f32.xlu0 %v1285
    %v1349 = vpop.xlane.xlu0 %1348
    %1350 = vadd.xlane.f32.xlu0 %v1287
    %v1351 = vpop.xlane.xlu0 %1350
    %1352 = vadd.xlane.f32.xlu0 %v1289
    %v1353 = vpop.xlane.xlu0 %1352
    %1354 = vadd.xlane.f32.xlu0 %v1291
    %v1355 = vpop.xlane.xlu0 %1354
    %1356 = vadd.xlane.f32.xlu0 %v1293
    %v1357 = vpop.xlane.xlu0 %1356
    %1358 = vadd.xlane.f32.xlu0 %v1295
    %v1359 = vpop.xlane.xlu0 %1358
    %1360 = vadd.xlane.f32.xlu0 %v1297
    %v1361 = vpop.xlane.xlu0 %1360
    %1362 = vadd.xlane.f32.xlu0 %v1299
    %v1363 = vpop.xlane.xlu0 %1362
    %1364 = vadd.xlane.f32.xlu0 %v1301
    %v1365 = vpop.xlane.xlu0 %1364
    %1366 = vadd.xlane.f32.xlu0 %v1303
    %v1367 = vpop.xlane.xlu0 %1366
    %1368 = vadd.xlane.f32.xlu0 %v1305
    %v1369 = vpop.xlane.xlu0 %1368
    %1370 = vadd.xlane.f32.xlu0 %v1307
    %v1371 = vpop.xlane.xlu0 %1370
    %1372 = vadd.xlane.f32.xlu0 %v1309
    %v1373 = vpop.xlane.xlu0 %1372
    %1374 = vadd.xlane.f32.xlu0 %v1311
    %v1375 = vpop.xlane.xlu0 %1374
    %1376 = vadd.xlane.f32.xlu0 %v1313
    %v1377 = vpop.xlane.xlu0 %1376
    %1378 = vadd.xlane.f32.xlu0 %v1315
    %v1379 = vpop.xlane.xlu0 %1378
    %1380 = vadd.xlane.f32.xlu0 %v1317
    %v1381 = vpop.xlane.xlu0 %1380
    %v1382 = vlog2.pop %v1319
    %v1383 = vmul.f32 %v1382, 0.6931472
    %v1384 = vlog2.pop %v1321
    %v1385 = vmul.f32 %v1384, 0.6931472
    %v1386 = vlog2.pop %v1323
    %v1387 = vmul.f32 %v1386, 0.6931472
    %v1388 = vlog2.pop %v1325
    %v1389 = vmul.f32 %v1388, 0.6931472
    %v1390 = vlog2.pop %v1327
    %v1391 = vmul.f32 %v1390, 0.6931472
    %v1392 = vlog2.pop %v1329
    %v1393 = vmul.f32 %v1392, 0.6931472
    %v1394 = vlog2.pop %v1331
    %v1395 = vmul.f32 %v1394, 0.6931472
    %v1396 = vlog2.pop %v1333
    %v1397 = vmul.f32 %v1396, 0.6931472
    %v1398 = vlog2.pop %v1335
    %v1399 = vmul.f32 %v1398, 0.6931472
    %v1400 = vlog2.pop %v1337
    %v1401 = vmul.f32 %v1400, 0.6931472
    %v1402 = vlog2.pop %v1339
    %v1403 = vmul.f32 %v1402, 0.6931472
    %v1404 = vlog2.pop %v1341
    %v1405 = vmul.f32 %v1404, 0.6931472
    %v1406 = vlog2.pop %v1343
    %v1407 = vmul.f32 %v1406, 0.6931472
    %v1408 = vlog2.pop %v1345
    %v1409 = vmul.f32 %v1408, 0.6931472
    %v1410 = vlog2.pop %v1347
    %v1411 = vmul.f32 %v1410, 0.6931472
    %v1412 = vlog2.pop %v1349
    %v1413 = vmul.f32 %v1412, 0.6931472
    %v1414 = vlog2.pop %v1351
    %v1415 = vmul.f32 %v1414, 0.6931472
    %v1416 = vlog2.pop %v1353
    %v1417 = vmul.f32 %v1416, 0.6931472
    %v1418 = vlog2.pop %v1355
    %v1419 = vmul.f32 %v1418, 0.6931472
    %v1420 = vlog2.pop %v1357
    %v1421 = vmul.f32 %v1420, 0.6931472
    %v1422 = vlog2.pop %v1359
    %v1423 = vmul.f32 %v1422, 0.6931472
    %v1424 = vlog2.pop %v1361
    %v1425 = vmul.f32 %v1424, 0.6931472
    %v1426 = vlog2.pop %v1363
    %v1427 = vmul.f32 %v1426, 0.6931472
    %v1428 = vlog2.pop %v1365
    %v1429 = vmul.f32 %v1428, 0.6931472
    %v1430 = vlog2.pop %v1367
    %v1431 = vmul.f32 %v1430, 0.6931472
    %v1432 = vlog2.pop %v1369
    %v1433 = vmul.f32 %v1432, 0.6931472
    %v1434 = vlog2.pop %v1371
    %v1435 = vmul.f32 %v1434, 0.6931472
    %v1436 = vlog2.pop %v1373
    %v1437 = vmul.f32 %v1436, 0.6931472
    %v1438 = vlog2.pop %v1375
    %v1439 = vmul.f32 %v1438, 0.6931472
    %v1440 = vlog2.pop %v1377
    %v1441 = vmul.f32 %v1440, 0.6931472
    %v1442 = vlog2.pop %v1379
    %v1443 = vmul.f32 %v1442, 0.6931472
    %v1444 = vlog2.pop %v1381
    %v1445 = vmul.f32 %v1444, 0.6931472
    %v1446 = vsub.f32 %v1222, %v1383
    %v1447 = vsub.f32 %v1223, %v1385
    %v1448 = vsub.f32 %v1224, %v1387
    %v1449 = vsub.f32 %v1225, %v1389
    %v1450 = vsub.f32 %v1226, %v1391
    %v1451 = vsub.f32 %v1227, %v1393
    %v1452 = vsub.f32 %v1228, %v1395
    %v1453 = vsub.f32 %v1229, %v1397
    %v1454 = vsub.f32 %v1230, %v1399
    %v1455 = vsub.f32 %v1231, %v1401
    %v1456 = vsub.f32 %v1232, %v1403
    %v1457 = vsub.f32 %v1233, %v1405
    %v1458 = vsub.f32 %v1234, %v1407
    %v1459 = vsub.f32 %v1235, %v1409
    %v1460 = vsub.f32 %v1236, %v1411
    %v1461 = vsub.f32 %v1237, %v1413
    %v1462 = vsub.f32 %v1238, %v1415
    %v1463 = vsub.f32 %v1239, %v1417
    %v1464 = vsub.f32 %v1240, %v1419
    %v1465 = vsub.f32 %v1241, %v1421
    %v1466 = vsub.f32 %v1242, %v1423
    %v1467 = vsub.f32 %v1243, %v1425
    %v1468 = vsub.f32 %v1244, %v1427
    %v1469 = vsub.f32 %v1245, %v1429
    %v1470 = vsub.f32 %v1246, %v1431
    %v1471 = vsub.f32 %v1247, %v1433
    %v1472 = vsub.f32 %v1248, %v1435
    %v1473 = vsub.f32 %v1249, %v1437
    %v1474 = vsub.f32 %v1250, %v1439
    %v1475 = vsub.f32 %v1251, %v1441
    %v1476 = vsub.f32 %v1252, %v1443
    %v1477 = vsub.f32 %v1253, %v1445
    %1478 = vst [vmem:[#allocation5] sm:$0xff] %v1446
    %1479 = vst [vmem:[#allocation5 + $0x8] sm:$0xff] %v1447
    %1480 = vst [vmem:[#allocation5 + $0x10] sm:$0xff] %v1448
    %1481 = vst [vmem:[#allocation5 + $0x18] sm:$0xff] %v1449
    %1482 = vst [vmem:[#allocation5 + $0x20] sm:$0xff] %v1450
    %1483 = vst [vmem:[#allocation5 + $0x28] sm:$0xff] %v1451
    %1484 = vst [vmem:[#allocation5 + $0x30] sm:$0xff] %v1452
    %1485 = vst [vmem:[#allocation5 + $0x38] sm:$0xff] %v1453
    %1486 = vst [vmem:[#allocation5 + $0x40] sm:$0xff] %v1454
    %1487 = vst [vmem:[#allocation5 + $0x48] sm:$0xff] %v1455
    %1488 = vst [vmem:[#allocation5 + $0x50] sm:$0xff] %v1456
    %1489 = vst [vmem:[#allocation5 + $0x58] sm:$0xff] %v1457
    %1490 = vst [vmem:[#allocation5 + $0x60] sm:$0xff] %v1458
    %1491 = vst [vmem:[#allocation5 + $0x68] sm:$0xff] %v1459
    %1492 = vst [vmem:[#allocation5 + $0x70] sm:$0xff] %v1460
    %1493 = vst [vmem:[#allocation5 + $0x78] sm:$0xff] %v1461
    %1494 = vst [vmem:[#allocation5 + $0x80] sm:$0xff] %v1462
    %1495 = vst [vmem:[#allocation5 + $0x88] sm:$0xff] %v1463
    %1496 = vst [vmem:[#allocation5 + $0x90] sm:$0xff] %v1464
    %1497 = vst [vmem:[#allocation5 + $0x98] sm:$0xff] %v1465
    %1498 = vst [vmem:[#allocation5 + $0xa0] sm:$0xff] %v1466
    %1499 = vst [vmem:[#allocation5 + $0xa8] sm:$0xff] %v1467
    %1500 = vst [vmem:[#allocation5 + $0xb0] sm:$0xff] %v1468
    %1501 = vst [vmem:[#allocation5 + $0xb8] sm:$0xff] %v1469
    %1502 = vst [vmem:[#allocation5 + $0xc0] sm:$0xff] %v1470
    %1503 = vst [vmem:[#allocation5 + $0xc8] sm:$0xff] %v1471
    %1504 = vst [vmem:[#allocation5 + $0xd0] sm:$0xff] %v1472
    %1505 = vst [vmem:[#allocation5 + $0xd8] sm:$0xff] %v1473
    %1506 = vst [vmem:[#allocation5 + $0xe0] sm:$0xff] %v1474
    %1507 = vst [vmem:[#allocation5 + $0xe8] sm:$0xff] %v1475
    %1508 = vst [vmem:[#allocation5 + $0xf0] sm:$0xff] %v1476
    %1509 = vst [vmem:[#allocation5 + $0xf8] sm:$0xff] %v1477
    // Predicated region
    $region26: #{tpu_custom_call.1} parent=1 // pred_check
      _
    $region27: #{tpu_custom_call.1} parent=1 // pred_check_branch
      %1511 = sbr.rel (0) target = $region29
    $region28: #{tpu_custom_call.1} parent=1 // pred_region
      %s1513 = ssub.s32 4096, 4096
      %1514 = vsyncadd [#allocation4], %s1513
      %s1515 = sshll.u32 [#allocation5], 4
      %s1516 = int_to_ptr.vmem [resolvable:$true] %s1515
      %1521 = dma.vmem_to_hbm [thread:$0]  %s1516, 4096, %s5, [#allocation4], 128, 128, 8
    $region29: #{tpu_custom_call.1} parent=1 // pred_fallthru
      _
    // Predicated region
    $region30: #{tpu_custom_call.1} parent=1 // pred_check
      _
    $region31: #{tpu_custom_call.1} parent=1 // pred_check_branch
      %1523 = sbr.rel (0) target = $region33
    $region32: #{tpu_custom_call.1} parent=1 // pred_region
      %1524 = dma.done [#allocation4], 4096
    $region33: #{tpu_custom_call.1} parent=1 // pred_fallthru
      _
    %1525 = vsyncpa [#allocation3], 1
    %1526 = vsyncpa [#allocation4], 1

</llo_original>
